<compile_context>
chip_gen: v5e
topology: v5e:2x2
jax: 0.10.0
libtpu: 0.0.40
codegen_flags: <defaults>
</compile_context>

<pallas_src>
import functools

import jax
import jax.numpy as jnp
from jax.experimental import pallas as pl
from jax.experimental.pallas import tpu as pltpu

HIDDEN_DIM = 640   # hard-coded in ConditionalGenerativeNet
QYX_HIDDEN = 64    # hard-coded in InferenceNet (q(y|x) hidden)
QZX_HIDDEN = 64    # hard-coded in InferenceNet (q(z|x,y) hidden)

assert QYX_HIDDEN + QZX_HIDDEN == 128  # the w1|w2x lane-dense fusion relies on this


def _round_up(n, m):
    return ((n + m - 1) // m) * m


# ---------------------------------------------------------------------------
# elementwise helpers (plain jnp: shared by kernel and pure-JAX reference)
# ---------------------------------------------------------------------------
def _softplus(x):
    # matches F.softplus(beta=1, threshold=20)
    return jnp.where(x > 20.0, x, jnp.log1p(jnp.exp(jnp.minimum(x, 20.0))))


def _sigmoid(x):
    # exact 1 / (1 + exp(-x)); exp overflow for very negative x -> 1/inf = 0
    return 1.0 / (1.0 + jnp.exp(-x))


def _softmax(x):
    m = jnp.max(x, axis=-1, keepdims=True)
    e = jnp.exp(x - m)
    return e / jnp.sum(e, axis=-1, keepdims=True)


# ---------------------------------------------------------------------------
# packed-slab layout (all section boundaries are dtype-tile aligned)
# ---------------------------------------------------------------------------
def _layout(x_dim, cond_dim, z_dim, y_dim):
    assert y_dim <= 2 * QYX_HIDDEN and 2 * z_dim <= 2 * QYX_HIDDEN
    L = {}
    L["xin_w"] = _round_up(x_dim, 128)          # lane-padded x input width
    L["xrec_w"] = _round_up(x_dim, 128)         # lane-padded x_rec output width
    L["aux_w"] = _round_up(cond_dim + y_dim + z_dim, 128)
    L["small_w"] = _round_up(5 * z_dim + 3 * y_dim, 128)
    # slab A (f32, 128 lanes): inference-net weights; 8-row aligned sections
    L["o_w12"] = 0                              # [w1 | w2x]  (xin_w rows)
    L["o_w2y"] = L["xin_w"]                     # w2y         (y_dim rows)
    L["o_wlog"] = L["o_w2y"] + _round_up(y_dim, 8)
    L["o_wmv"] = L["o_wlog"] + QYX_HIDDEN       # [wmu | wvar]
    L["o_wymv"] = L["o_wmv"] + QZX_HIDDEN       # [wymu | wyvar]
    L["o_bias"] = L["o_wymv"] + _round_up(y_dim, 8)
    L["wa_rows"] = L["o_bias"] + 8
    # slab G (bf16, 640 lanes): big generative/recon weights; 16-row aligned
    L["o_wr1"] = 0                              # wr1 (640 rows)
    L["o_wgzc"] = HIDDEN_DIM                    # [wgz ; wgc]
    L["wg_rows"] = HIDDEN_DIM + _round_up(z_dim + cond_dim, 16)
    # slab bG (f32): wide-path biases kept in f32 (no bf16 round-trip)
    L["gb_cols"] = _round_up(max(HIDDEN_DIM, L["xrec_w"]), 128)
    return L


# ---------------------------------------------------------------------------
# fused forward kernel
# ---------------------------------------------------------------------------
def _cgmvae_kernel(x_dim, cond_dim, z_dim, y_dim, L,
                   temp_ref, x_ref, aux_ref, wa_ref, wg_ref, bg_ref, wr_ref,
                   small_ref, xrec_ref, skill_ref):
    f32, bf16 = jnp.float32, jnp.bfloat16

    x = x_ref[...]                                  # (TB, xin_w) f32, lane-dense
    aux = aux_ref[...]                              # (TB, aux_w) packed cond|gum|eps
    cond = aux[:, 0:cond_dim]
    gum = aux[:, cond_dim:cond_dim + y_dim]
    eps = aux[:, cond_dim + y_dim:cond_dim + y_dim + z_dim]
    inv_t = 1.0 / temp_ref[0, 0]                    # SMEM scalar (no recompile)

    # --- slab A (f32) slices: every section starts on an 8-row boundary ------
    w12 = wa_ref[0:L["xin_w"], :]                                   # [w1 | w2x]
    w2y = wa_ref[L["o_w2y"]:L["o_w2y"] + y_dim, 0:QZX_HIDDEN]
    wlog = wa_ref[L["o_wlog"]:L["o_wlog"] + QYX_HIDDEN, 0:y_dim]
    wmv = wa_ref[L["o_wmv"]:L["o_wmv"] + QZX_HIDDEN, 0:2 * z_dim]   # [wmu | wvar]
    wymv = wa_ref[L["o_wymv"]:L["o_wymv"] + y_dim, 0:2 * z_dim]     # [wymu| wyvar]
    ob = L["o_bias"]
    b12 = wa_ref[ob:ob + 1, :]                                      # [b1 | b2]
    blog = wa_ref[ob + 1:ob + 2, 0:y_dim]
    bmv = wa_ref[ob + 2:ob + 3, 0:2 * z_dim]
    bymv = wa_ref[ob + 3:ob + 4, 0:2 * z_dim]

    # --- q(y|x) + x-contribution of q(z|x,y): ONE lane-dense f32 MXU call ----
    xh = jnp.dot(x, w12, preferred_element_type=f32) + b12          # (TB, 128)
    h1 = jnp.maximum(xh[:, 0:QYX_HIDDEN], 0.0)
    logits = jnp.dot(h1, wlog, preferred_element_type=f32) + blog
    prob = _softmax(logits)
    y = _softmax((logits + gum) * inv_t)
    # TODO(synk): GumbelSoftmax hard=1 straight-through one-hot path not
    #             implemented (module forward uses the default hard=0).

    # --- q(z|x,y): reuse the x@w2x part already computed in xh ---------------
    h2 = jnp.maximum(
        xh[:, QYX_HIDDEN:QYX_HIDDEN + QZX_HIDDEN]
        + jnp.dot(y, w2y, preferred_element_type=f32), 0.0)
    muvar = jnp.dot(h2, wmv, preferred_element_type=f32) + bmv      # fused mu|var
    mu = muvar[:, 0:z_dim]
    var = _softplus(muvar[:, z_dim:2 * z_dim])
    z = mu + eps * jnp.sqrt(var + 1e-10)

    # --- p(z|y): fused y_mu | y_var projection --------------------------------
    ymuvar = jnp.dot(y, wymv, preferred_element_type=f32) + bymv
    y_mu = ymuvar[:, 0:z_dim]
    y_var = _softplus(ymuvar[:, z_dim:2 * z_dim])

    # --- p(x|z,c): fused [z | cond] @ [wgz ; wgc] bf16 MXU, f32 acc ----------
    bg = bg_ref[0:1, 0:HIDDEN_DIM]                                  # f32 biases
    br1 = bg_ref[1:2, 0:HIDDEN_DIM]
    br2 = bg_ref[2:3, 0:L["xrec_w"]]
    zc = jnp.concatenate([z, cond], axis=-1).astype(bf16)           # (TB, z+c)
    wgzc = wg_ref[L["o_wgzc"]:L["o_wgzc"] + z_dim + cond_dim, :]
    skill = _sigmoid(jnp.dot(zc, wgzc, preferred_element_type=f32) + bg)

    # --- recon: Linear(640,640) -> ReLU -> Linear(640,x_dim) -> Sigmoid ------
    wr1 = wg_ref[0:HIDDEN_DIM, :]                                   # bf16
    h3 = jnp.maximum(
        jnp.dot(skill.astype(bf16), wr1, preferred_element_type=f32) + br1, 0.0)
    wr2 = wr_ref[0:HIDDEN_DIM, :]                                   # bf16
    x_rec = _sigmoid(
        jnp.dot(h3.astype(bf16), wr2, preferred_element_type=f32) + br2)

    # --- outputs: 8 narrow tensors packed into one lane-dense (TB,128k) slab -
    pieces = [mu, var, z, y_mu, y_var, logits, prob, y]
    pad = L["small_w"] - (5 * z_dim + 3 * y_dim)
    if pad:
        pieces.append(jnp.zeros((x.shape[0], pad), f32))
    small_ref[...] = jnp.concatenate(pieces, axis=-1)
    xrec_ref[...] = x_rec.astype(xrec_ref.dtype)
    skill_ref[...] = skill.astype(skill_ref.dtype)


# ---------------------------------------------------------------------------
# parameter init (xavier_normal_ weights, zero biases) — deterministic
# ---------------------------------------------------------------------------
def init_params(key, x_dim, condition_dim, z_dim, y_dim):
    def xavier(k, fan_in, fan_out):
        std = (2.0 / (fan_in + fan_out)) ** 0.5
        return std * jax.random.normal(k, (fan_in, fan_out), dtype=jnp.float32)

    ks = jax.random.split(key, 12)
    p = {}
    # InferenceNet.inference_qyx
    p["w1"] = xavier(ks[0], x_dim, QYX_HIDDEN)
    p["b1"] = jnp.zeros((1, QYX_HIDDEN), jnp.float32)
    p["wlog"] = xavier(ks[1], QYX_HIDDEN, y_dim)
    p["blog"] = jnp.zeros((1, y_dim), jnp.float32)
    # InferenceNet.inference_qzyx (weight over cat(x,y) split into two pieces)
    w2 = xavier(ks[2], x_dim + y_dim, QZX_HIDDEN)
    p["w2x"], p["w2y"] = w2[:x_dim], w2[x_dim:]
    p["b2"] = jnp.zeros((1, QZX_HIDDEN), jnp.float32)
    p["wmu"] = xavier(ks[3], QZX_HIDDEN, z_dim)
    p["bmu"] = jnp.zeros((1, z_dim), jnp.float32)
    p["wvar"] = xavier(ks[4], QZX_HIDDEN, z_dim)
    p["bvar"] = jnp.zeros((1, z_dim), jnp.float32)
    # ConditionalGenerativeNet p(z|y)
    p["wymu"] = xavier(ks[5], y_dim, z_dim)
    p["bymu"] = jnp.zeros((1, z_dim), jnp.float32)
    p["wyvar"] = xavier(ks[6], y_dim, z_dim)
    p["byvar"] = jnp.zeros((1, z_dim), jnp.float32)
    # ConditionalGenerativeNet p(x|z,c)  (weight over cat(z,c) split)
    wg = xavier(ks[7], z_dim + condition_dim, HIDDEN_DIM)
    p["wgz"], p["wgc"] = wg[:z_dim], wg[z_dim:]
    p["bg"] = jnp.zeros((1, HIDDEN_DIM), jnp.float32)
    # recon_model
    p["wr1"] = xavier(ks[8], HIDDEN_DIM, HIDDEN_DIM)
    p["br1"] = jnp.zeros((1, HIDDEN_DIM), jnp.float32)
    p["wr2"] = xavier(ks[9], HIDDEN_DIM, x_dim)
    p["br2"] = jnp.zeros((1, x_dim), jnp.float32)
    return p


def pack_params(p, x_dim, cond_dim, z_dim, y_dim):
    """Pack the 22 parameter tensors into 4 tile-aligned VMEM slabs."""
    f32, bf16 = jnp.float32, jnp.bfloat16
    L = _layout(x_dim, cond_dim, z_dim, y_dim)

    # slab A (f32, 128 lanes): inference-net weights + small biases
    wa = jnp.zeros((L["wa_rows"], 2 * QYX_HIDDEN), f32)
    wa = wa.at[0:x_dim, 0:QYX_HIDDEN].set(p["w1"].astype(f32))
    wa = wa.at[0:x_dim, QYX_HIDDEN:].set(p["w2x"].astype(f32))
    wa = wa.at[L["o_w2y"]:L["o_w2y"] + y_dim, 0:QZX_HIDDEN].set(p["w2y"].astype(f32))
    wa = wa.at[L["o_wlog"]:L["o_wlog"] + QYX_HIDDEN, 0:y_dim].set(p["wlog"].astype(f32))
    wa = wa.at[L["o_wmv"]:L["o_wmv"] + QZX_HIDDEN, 0:z_dim].set(p["wmu"].astype(f32))
    wa = wa.at[L["o_wmv"]:L["o_wmv"] + QZX_HIDDEN, z_dim:2 * z_dim].set(p["wvar"].astype(f32))
    wa = wa.at[L["o_wymv"]:L["o_wymv"] + y_dim, 0:z_dim].set(p["wymu"].astype(f32))
    wa = wa.at[L["o_wymv"]:L["o_wymv"] + y_dim, z_dim:2 * z_dim].set(p["wyvar"].astype(f32))
    ob = L["o_bias"]
    wa = wa.at[ob, 0:QYX_HIDDEN].set(p["b1"].reshape(-1))
    wa = wa.at[ob, QYX_HIDDEN:].set(p["b2"].reshape(-1))
    wa = wa.at[ob + 1, 0:y_dim].set(p["blog"].reshape(-1))
    wa = wa.at[ob + 2, 0:z_dim].set(p["bmu"].reshape(-1))
    wa = wa.at[ob + 2, z_dim:2 * z_dim].set(p["bvar"].reshape(-1))
    wa = wa.at[ob + 3, 0:z_dim].set(p["bymu"].reshape(-1))
    wa = wa.at[ob + 3, z_dim:2 * z_dim].set(p["byvar"].reshape(-1))

    # slab G (bf16, 640 lanes): wr1 (aligned at row 0) and fused [wgz ; wgc]
    wg = jnp.zeros((L["wg_rows"], HIDDEN_DIM), bf16)
    wg = wg.at[0:HIDDEN_DIM, :].set(p["wr1"].astype(bf16))
    wg = wg.at[L["o_wgzc"]:L["o_wgzc"] + z_dim, :].set(p["wgz"].astype(bf16))
    wg = wg.at[L["o_wgzc"] + z_dim:L["o_wgzc"] + z_dim + cond_dim, :].set(
        p["wgc"].astype(bf16))

    # slab bG (f32): 640-wide-path biases (bg, br1) and br2 — stay f32
    bgs = jnp.zeros((8, L["gb_cols"]), f32)
    bgs = bgs.at[0, 0:HIDDEN_DIM].set(p["bg"].reshape(-1))
    bgs = bgs.at[1, 0:HIDDEN_DIM].set(p["br1"].reshape(-1))
    bgs = bgs.at[2, 0:x_dim].set(p["br2"].reshape(-1))

    # slab R (bf16): final recon projection, lane-padded columns
    wr = jnp.zeros((HIDDEN_DIM, L["xrec_w"]), bf16)
    wr = wr.at[:, 0:x_dim].set(p["wr2"].astype(bf16))
    return wa, wg, bgs, wr


# ---------------------------------------------------------------------------
# wrapper: flatten, pad, pack, pallas_call, unpack
# ---------------------------------------------------------------------------
def cgmvae_forward(params, x_nchw, condition, gumbel_noise, eps_noise,
                   temperature=1.0, block_b=1024, low_precision_outputs=False):
    f32 = jnp.float32
    B = x_nchw.shape[0]
    x_flat = x_nchw.reshape(B, -1).astype(f32)          # x.view(x.size(0), -1)
    x_dim = x_flat.shape[1]
    cond_dim = condition.shape[1]
    y_dim = gumbel_noise.shape[1]
    z_dim = eps_noise.shape[1]
    L = _layout(x_dim, cond_dim, z_dim, y_dim)

    # large batch tile (amortizes per-step overhead & MXU weight pushes);
    # ~12 MiB VMEM at TB=1024 — fits every generation including v7x.
    TB = _round_up(min(block_b, _round_up(B, 8)), 8)
    B_pad = _round_up(B, TB)
    grid = (B_pad // TB,)

    def pad2(a, rows, cols):
        return jnp.pad(a, ((0, rows - a.shape[0]), (0, cols - a.shape[1])))

    x_p = pad2(x_flat, B_pad, L["xin_w"])               # lane-dense x input
    aux = jnp.concatenate([condition.astype(f32), gumbel_noise.astype(f32),
                           eps_noise.astype(f32)], axis=1)
    aux_p = pad2(aux, B_pad, L["aux_w"])                # one packed aux input
    temp = jnp.full((1, 1), temperature, f32)           # SMEM scalar

    wa, wg, bgs, wr = pack_params(params, x_dim, cond_dim, z_dim, y_dim)

    out_dtype = jnp.bfloat16 if low_precision_outputs else f32
    out_shape = (
        jax.ShapeDtypeStruct((B_pad, L["small_w"]), f32),       # packed narrow outs
        jax.ShapeDtypeStruct((B_pad, L["xrec_w"]), out_dtype),  # x_rec (lane-padded)
        jax.ShapeDtypeStruct((B_pad, HIDDEN_DIM), out_dtype),   # skill
    )

    batch_spec = lambda w: pl.BlockSpec((TB, w), lambda i: (i, 0))
    # pinned (constant index_map) -> DMA'd once, VMEM-resident across steps
    pinned = lambda a: pl.BlockSpec(a.shape, lambda i: (0, 0))

    in_specs = [
        pl.BlockSpec(memory_space=pltpu.MemorySpace.SMEM),      # temperature
        batch_spec(L["xin_w"]), batch_spec(L["aux_w"]),
        pinned(wa), pinned(wg), pinned(bgs), pinned(wr),
    ]
    out_specs = (batch_spec(L["small_w"]), batch_spec(L["xrec_w"]),
                 batch_spec(HIDDEN_DIM))

    kernel = functools.partial(_cgmvae_kernel, x_dim, cond_dim, z_dim, y_dim, L)
    small, x_rec, skill = pl.pallas_call(
        kernel,
        grid=grid,
        in_specs=in_specs,
        out_specs=out_specs,
        out_shape=out_shape,
        compiler_params=pltpu.CompilerParams(
            # TODO(synk): on v7x switch to pltpu.CORE_PARALLEL (with an even
            # grid) to split the batch axis across both TensorCores.
            dimension_semantics=("parallel",),
            vmem_limit_bytes=48 << 20),
    )(temp, x_p, aux_p, wa, wg, bgs, wr)

    z, y = z_dim, y_dim
    return {
        "mean": small[:B, 0:z],
        "var": small[:B, z:2 * z],
        "gaussian": small[:B, 2 * z:3 * z],
        "y_mean": small[:B, 3 * z:4 * z],
        "y_var": small[:B, 4 * z:5 * z],
        "logits": small[:B, 5 * z:5 * z + y],
        "prob_cat": small[:B, 5 * z + y:5 * z + 2 * y],
        "categorical": small[:B, 5 * z + 2 * y:5 * z + 3 * y],
        "x_rec": x_rec[:B, :x_dim],
        "skill": skill[:B],
    }


# ---------------------------------------------------------------------------
# pure-JAX reference (mirrors the PyTorch module's forward, hard=0 path)
# ---------------------------------------------------------------------------
def reference_forward(p, x_nchw, condition, gumbel_noise, eps_noise, temperature):
    hp = jax.lax.Precision.HIGHEST
    x = x_nchw.reshape(x_nchw.shape[0], -1).astype(jnp.float32)
    h1 = jnp.maximum(jnp.dot(x, p["w1"], precision=hp) + p["b1"], 0.0)
    logits = jnp.dot(h1, p["wlog"], precision=hp) + p["blog"]
    prob = _softmax(logits)
    y = _softmax((logits + gumbel_noise) / temperature)
    h2 = jnp.maximum(jnp.dot(x, p["w2x"], precision=hp)
                     + jnp.dot(y, p["w2y"], precision=hp) + p["b2"], 0.0)
    mu = jnp.dot(h2, p["wmu"], precision=hp) + p["bmu"]
    var = _softplus(jnp.dot(h2, p["wvar"], precision=hp) + p["bvar"])
    z = mu + eps_noise * jnp.sqrt(var + 1e-10)
    y_mu = jnp.dot(y, p["wymu"], precision=hp) + p["bymu"]
    y_var = _softplus(jnp.dot(y, p["wyvar"], precision=hp) + p["byvar"])
    skill = _sigmoid(jnp.dot(z, p["wgz"], precision=hp)
                     + jnp.dot(condition, p["wgc"], precision=hp) + p["bg"])
    h3 = jnp.maximum(jnp.dot(skill, p["wr1"], precision=hp) + p["br1"], 0.0)
    x_rec = _sigmoid(jnp.dot(h3, p["wr2"], precision=hp) + p["br2"])
    return {"mean": mu, "var": var, "gaussian": z, "logits": logits,
            "prob_cat": prob, "categorical": y, "y_mean": y_mu, "y_var": y_var,
            "x_rec": x_rec, "skill": skill}


# ---------------------------------------------------------------------------
if __name__ == "__main__":
    # small shapes consistent with the module
    B, C, H, W = 2, 4, 4, 4        # x_dim = 64
    x_dim = C * H * W
    condition_dim = 16
    z_dim = 8
    y_dim = 6
    temperature = 1.0

    root = jax.random.PRNGKey(0)
    k_param, k_x, k_cond, k_gumbel, k_eps = jax.random.split(root, 5)

    params = init_params(k_param, x_dim, condition_dim, z_dim, y_dim)

    x = jax.random.uniform(k_x, (B, C, H, W), dtype=jnp.float32)      # NCHW
    condition = jax.random.normal(k_cond, (B, condition_dim), dtype=jnp.float32)

    # deterministic noise for the stochastic layers
    u = jax.random.uniform(k_gumbel, (B, y_dim), dtype=jnp.float32,
                           minval=1e-6, maxval=1.0 - 1e-6)
    gumbel_noise = -jnp.log(-jnp.log(u + 1e-20) + 1e-20)              # Gumbel(0,1)
    eps_noise = jax.random.normal(k_eps, (B, z_dim), dtype=jnp.float32)

    out = cgmvae_forward(params, x, condition, gumbel_noise, eps_noise,
                         temperature=temperature)
    jax.block_until_ready(out)

    # shape checks
    assert out["x_rec"].shape == (B, x_dim)
    assert out["skill"].shape == (B, HIDDEN_DIM)
    assert out["prob_cat"].shape == (B, y_dim)
    assert out["mean"].shape == (B, z_dim)
    assert out["categorical"].shape == (B, y_dim)
    assert bool(jnp.all(jnp.isfinite(out["x_rec"])))
    assert bool(jnp.all(jnp.isfinite(out["skill"])))
    assert bool(jnp.allclose(jnp.sum(out["prob_cat"], axis=-1), 1.0, atol=1e-4))

    # numerical check against a pure-JAX reference of the PyTorch forward
    ref = reference_forward(params, x, condition, gumbel_noise, eps_noise,
                            temperature)
    for k in ("mean", "var", "gaussian", "logits", "prob_cat", "categorical",
              "y_mean", "y_var"):                                   # f32 path
        assert bool(jnp.allclose(out[k], ref[k], rtol=5e-3, atol=5e-3)), k
    for k in ("skill", "x_rec"):                                    # bf16 MXU path
        assert bool(jnp.allclose(out[k], ref[k], rtol=5e-2, atol=5e-2)), k

    print("KERNEL_OK")
</pallas_src>

<mosaic_0001>
module attributes {stable_mosaic.version = 11 : i64} {
  func.func @_cgmvae_kernel(%arg0: i32, %arg1: memref<1x1xf32, #tpu.memory_space<smem>>, %arg2: memref<8x128xf32, #tpu.memory_space<vmem>>, %arg3: memref<8x128xf32, #tpu.memory_space<vmem>>, %arg4: memref<280x128xf32, #tpu.memory_space<vmem>>, %arg5: memref<672x640xbf16, #tpu.memory_space<vmem>>, %arg6: memref<8x640xf32, #tpu.memory_space<vmem>>, %arg7: memref<640x128xbf16, #tpu.memory_space<vmem>>, %arg8: memref<8x128xf32, #tpu.memory_space<vmem>>, %arg9: memref<8x128xf32, #tpu.memory_space<vmem>>, %arg10: memref<8x640xf32, #tpu.memory_space<vmem>>) attributes {dimension_semantics = [#tpu.dimension_semantics<parallel>], iteration_bounds = array<i64: 1>, scalar_prefetch = 0 : i64, scratch_operands = 0 : i64, tpu.core_type = #tpu.core_type<tc>, window_params = [{transform_indices = @transform_0, window_bounds = array<i64: 1, 1>}, {transform_indices = @transform_1, window_bounds = array<i64: 8, 128>}, {transform_indices = @transform_2, window_bounds = array<i64: 8, 128>}, {pipeline_mode = #tpu.pipeline_mode<synchronous>, transform_indices = @transform_3, window_bounds = array<i64: 280, 128>}, {pipeline_mode = #tpu.pipeline_mode<synchronous>, transform_indices = @transform_4, window_bounds = array<i64: 672, 640>}, {pipeline_mode = #tpu.pipeline_mode<synchronous>, transform_indices = @transform_5, window_bounds = array<i64: 8, 640>}, {pipeline_mode = #tpu.pipeline_mode<synchronous>, transform_indices = @transform_6, window_bounds = array<i64: 640, 128>}, {transform_indices = @transform_7, window_bounds = array<i64: 8, 128>}, {transform_indices = @transform_8, window_bounds = array<i64: 8, 128>}, {transform_indices = @transform_9, window_bounds = array<i64: 8, 640>}]} {
    %c0 = arith.constant 0 : index
    %c0_0 = arith.constant 0 : index
    %0 = vector.load %arg2[%c0, %c0_0] : memref<8x128xf32, #tpu.memory_space<vmem>>, vector<8x128xf32>
    %c0_1 = arith.constant 0 : index
    %c0_2 = arith.constant 0 : index
    %1 = vector.load %arg3[%c0_1, %c0_2] : memref<8x128xf32, #tpu.memory_space<vmem>>, vector<8x128xf32>
    %2 = vector.extract_strided_slice %1 {offsets = [0, 0], sizes = [8, 16], strides = [1, 1]} : vector<8x128xf32> to vector<8x16xf32>
    %3 = vector.extract_strided_slice %1 {offsets = [0, 16], sizes = [8, 6], strides = [1, 1]} : vector<8x128xf32> to vector<8x6xf32>
    %4 = vector.extract_strided_slice %1 {offsets = [0, 22], sizes = [8, 8], strides = [1, 1]} : vector<8x128xf32> to vector<8x8xf32>
    %c0_3 = arith.constant 0 : index
    %c0_4 = arith.constant 0 : index
    %5 = memref.load %arg1[%c0_3, %c0_4] : memref<1x1xf32, #tpu.memory_space<smem>>
    %cst = arith.constant 1.000000e+00 : f32
    %6 = arith.divf %cst, %5 : f32
    %c0_5 = arith.constant 0 : index
    %c0_6 = arith.constant 0 : index
    %7 = vector.load %arg4[%c0_5, %c0_6] : memref<280x128xf32, #tpu.memory_space<vmem>>, vector<128x128xf32>
    %c128 = arith.constant 128 : index
    %c0_7 = arith.constant 0 : index
    %8 = vector.load %arg4[%c128, %c0_7] : memref<280x128xf32, #tpu.memory_space<vmem>>, vector<6x64xf32>
    %c136 = arith.constant 136 : index
    %c0_8 = arith.constant 0 : index
    %9 = vector.load %arg4[%c136, %c0_8] : memref<280x128xf32, #tpu.memory_space<vmem>>, vector<64x6xf32>
    %c200 = arith.constant 200 : index
    %c0_9 = arith.constant 0 : index
    %10 = vector.load %arg4[%c200, %c0_9] : memref<280x128xf32, #tpu.memory_space<vmem>>, vector<64x16xf32>
    %c264 = arith.constant 264 : index
    %c0_10 = arith.constant 0 : index
    %11 = vector.load %arg4[%c264, %c0_10] : memref<280x128xf32, #tpu.memory_space<vmem>>, vector<6x16xf32>
    %c272 = arith.constant 272 : index
    %c0_11 = arith.constant 0 : index
    %12 = vector.load %arg4[%c272, %c0_11] : memref<280x128xf32, #tpu.memory_space<vmem>>, vector<1x128xf32>
    %c273 = arith.constant 273 : index
    %c0_12 = arith.constant 0 : index
    %13 = vector.load %arg4[%c273, %c0_12] : memref<280x128xf32, #tpu.memory_space<vmem>>, vector<1x6xf32>
    %c274 = arith.constant 274 : index
    %c0_13 = arith.constant 0 : index
    %14 = vector.load %arg4[%c274, %c0_13] : memref<280x128xf32, #tpu.memory_space<vmem>>, vector<1x16xf32>
    %c275 = arith.constant 275 : index
    %c0_14 = arith.constant 0 : index
    %15 = vector.load %arg4[%c275, %c0_14] : memref<280x128xf32, #tpu.memory_space<vmem>>, vector<1x16xf32>
    %cst_15 = arith.constant dense<0.000000e+00> : vector<8x128xf32>
    %16 = tpu.matmul %0, %7, %cst_15 {dimension_numbers = #tpu.dot_dimension_numbers<[1], [0], [0], [1], [0, 0, 1, 1], [], []>} : vector<8x128xf32>, vector<128x128xf32>, vector<8x128xf32> -> vector<8x128xf32>
    %17 = vector.broadcast %12 : vector<1x128xf32> to vector<8x128xf32>
    %18 = arith.addf %16, %17 : vector<8x128xf32>
    %19 = vector.extract_strided_slice %18 {offsets = [0, 0], sizes = [8, 64], strides = [1, 1]} : vector<8x128xf32> to vector<8x64xf32>
    %cst_16 = arith.constant 0.000000e+00 : f32
    %20 = vector.broadcast %cst_16 : f32 to vector<8x64xf32>
    %21 = arith.maximumf %19, %20 : vector<8x64xf32>
    %cst_17 = arith.constant dense<0.000000e+00> : vector<8x6xf32>
    %22 = tpu.matmul %21, %9, %cst_17 {dimension_numbers = #tpu.dot_dimension_numbers<[1], [0], [0], [1], [0, 0, 1, 1], [], []>} : vector<8x64xf32>, vector<64x6xf32>, vector<8x6xf32> -> vector<8x6xf32>
    %23 = vector.broadcast %13 : vector<1x6xf32> to vector<8x6xf32>
    %24 = arith.addf %22, %23 : vector<8x6xf32>
    %cst_18 = arith.constant dense<0xFF800000> : vector<8xf32>
    %25 = vector.multi_reduction <maximumf>, %24, %cst_18 [1] : vector<8x6xf32> to vector<8xf32>
    %26 = vector.shape_cast %25 : vector<8xf32> to vector<8x1xf32>
    %27 = vector.broadcast %26 : vector<8x1xf32> to vector<8x6xf32>
    %28 = arith.subf %24, %27 : vector<8x6xf32>
    %29 = math.exp %28 : vector<8x6xf32>
    %cst_19 = arith.constant dense<0.000000e+00> : vector<8xf32>
    %30 = vector.multi_reduction <add>, %29, %cst_19 [1] : vector<8x6xf32> to vector<8xf32>
    %31 = vector.shape_cast %30 : vector<8xf32> to vector<8x1xf32>
    %32 = vector.broadcast %31 : vector<8x1xf32> to vector<8x6xf32>
    %33 = arith.divf %29, %32 : vector<8x6xf32>
    %34 = arith.addf %24, %3 : vector<8x6xf32>
    %35 = vector.broadcast %6 : f32 to vector<8x6xf32>
    %36 = arith.mulf %34, %35 : vector<8x6xf32>
    %cst_20 = arith.constant dense<0xFF800000> : vector<8xf32>
    %37 = vector.multi_reduction <maximumf>, %36, %cst_20 [1] : vector<8x6xf32> to vector<8xf32>
    %38 = vector.shape_cast %37 : vector<8xf32> to vector<8x1xf32>
    %39 = vector.broadcast %38 : vector<8x1xf32> to vector<8x6xf32>
    %40 = arith.subf %36, %39 : vector<8x6xf32>
    %41 = math.exp %40 : vector<8x6xf32>
    %cst_21 = arith.constant dense<0.000000e+00> : vector<8xf32>
    %42 = vector.multi_reduction <add>, %41, %cst_21 [1] : vector<8x6xf32> to vector<8xf32>
    %43 = vector.shape_cast %42 : vector<8xf32> to vector<8x1xf32>
    %44 = vector.broadcast %43 : vector<8x1xf32> to vector<8x6xf32>
    %45 = arith.divf %41, %44 : vector<8x6xf32>
    %46 = vector.extract_strided_slice %18 {offsets = [0, 64], sizes = [8, 64], strides = [1, 1]} : vector<8x128xf32> to vector<8x64xf32>
    %cst_22 = arith.constant dense<0.000000e+00> : vector<8x64xf32>
    %47 = tpu.matmul %45, %8, %cst_22 {dimension_numbers = #tpu.dot_dimension_numbers<[1], [0], [0], [1], [0, 0, 1, 1], [], []>} : vector<8x6xf32>, vector<6x64xf32>, vector<8x64xf32> -> vector<8x64xf32>
    %48 = arith.addf %46, %47 : vector<8x64xf32>
    %cst_23 = arith.constant 0.000000e+00 : f32
    %49 = vector.broadcast %cst_23 : f32 to vector<8x64xf32>
    %50 = arith.maximumf %48, %49 : vector<8x64xf32>
    %cst_24 = arith.constant dense<0.000000e+00> : vector<8x16xf32>
    %51 = tpu.matmul %50, %10, %cst_24 {dimension_numbers = #tpu.dot_dimension_numbers<[1], [0], [0], [1], [0, 0, 1, 1], [], []>} : vector<8x64xf32>, vector<64x16xf32>, vector<8x16xf32> -> vector<8x16xf32>
    %52 = vector.broadcast %14 : vector<1x16xf32> to vector<8x16xf32>
    %53 = arith.addf %51, %52 : vector<8x16xf32>
    %54 = vector.extract_strided_slice %53 {offsets = [0, 0], sizes = [8, 8], strides = [1, 1]} : vector<8x16xf32> to vector<8x8xf32>
    %55 = vector.extract_strided_slice %53 {offsets = [0, 8], sizes = [8, 8], strides = [1, 1]} : vector<8x16xf32> to vector<8x8xf32>
    %cst_25 = arith.constant 2.000000e+01 : f32
    %56 = vector.broadcast %cst_25 : f32 to vector<8x8xf32>
    %57 = arith.cmpf ogt, %55, %56 : vector<8x8xf32>
    %cst_26 = arith.constant 2.000000e+01 : f32
    %58 = vector.broadcast %cst_26 : f32 to vector<8x8xf32>
    %59 = arith.minimumf %55, %58 : vector<8x8xf32>
    %60 = math.exp %59 : vector<8x8xf32>
    %61 = math.log1p %60 : vector<8x8xf32>
    %62 = arith.select %57, %55, %61 : vector<8x8xi1>, vector<8x8xf32>
    %cst_27 = arith.constant 1.000000e-10 : f32
    %63 = vector.broadcast %cst_27 : f32 to vector<8x8xf32>
    %64 = arith.addf %62, %63 : vector<8x8xf32>
    %65 = math.sqrt %64 : vector<8x8xf32>
    %66 = arith.mulf %4, %65 : vector<8x8xf32>
    %67 = arith.addf %54, %66 : vector<8x8xf32>
    %cst_28 = arith.constant dense<0.000000e+00> : vector<8x16xf32>
    %68 = tpu.matmul %45, %11, %cst_28 {dimension_numbers = #tpu.dot_dimension_numbers<[1], [0], [0], [1], [0, 0, 1, 1], [], []>} : vector<8x6xf32>, vector<6x16xf32>, vector<8x16xf32> -> vector<8x16xf32>
    %69 = vector.broadcast %15 : vector<1x16xf32> to vector<8x16xf32>
    %70 = arith.addf %68, %69 : vector<8x16xf32>
    %71 = vector.extract_strided_slice %70 {offsets = [0, 0], sizes = [8, 8], strides = [1, 1]} : vector<8x16xf32> to vector<8x8xf32>
    %72 = vector.extract_strided_slice %70 {offsets = [0, 8], sizes = [8, 8], strides = [1, 1]} : vector<8x16xf32> to vector<8x8xf32>
    %cst_29 = arith.constant 2.000000e+01 : f32
    %73 = vector.broadcast %cst_29 : f32 to vector<8x8xf32>
    %74 = arith.cmpf ogt, %72, %73 : vector<8x8xf32>
    %cst_30 = arith.constant 2.000000e+01 : f32
    %75 = vector.broadcast %cst_30 : f32 to vector<8x8xf32>
    %76 = arith.minimumf %72, %75 : vector<8x8xf32>
    %77 = math.exp %76 : vector<8x8xf32>
    %78 = math.log1p %77 : vector<8x8xf32>
    %79 = arith.select %74, %72, %78 : vector<8x8xi1>, vector<8x8xf32>
    %c0_31 = arith.constant 0 : index
    %c0_32 = arith.constant 0 : index
    %80 = vector.load %arg6[%c0_31, %c0_32] : memref<8x640xf32, #tpu.memory_space<vmem>>, vector<1x640xf32>
    %c1 = arith.constant 1 : index
    %c0_33 = arith.constant 0 : index
    %81 = vector.load %arg6[%c1, %c0_33] : memref<8x640xf32, #tpu.memory_space<vmem>>, vector<1x640xf32>
    %c2 = arith.constant 2 : index
    %c0_34 = arith.constant 0 : index
    %82 = vector.load %arg6[%c2, %c0_34] : memref<8x640xf32, #tpu.memory_space<vmem>>, vector<1x128xf32>
    %83 = tpu.concatenate %67, %2 in 1 : vector<8x8xf32>, vector<8x16xf32> -> vector<8x24xf32>
    %84 = arith.truncf %83 : vector<8x24xf32> to vector<8x24xbf16>
    %c640 = arith.constant 640 : index
    %c0_35 = arith.constant 0 : index
    %85 = vector.load %arg5[%c640, %c0_35] : memref<672x640xbf16, #tpu.memory_space<vmem>>, vector<24x640xbf16>
    %cst_36 = arith.constant dense<0.000000e+00> : vector<8x640xf32>
    %86 = tpu.matmul %84, %85, %cst_36 {dimension_numbers = #tpu.dot_dimension_numbers<[1], [0], [0], [1], [0, 0, 1, 1], [], []>} : vector<8x24xbf16>, vector<24x640xbf16>, vector<8x640xf32> -> vector<8x640xf32>
    %87 = vector.broadcast %80 : vector<1x640xf32> to vector<8x640xf32>
    %88 = arith.addf %86, %87 : vector<8x640xf32>
    %cst_37 = arith.constant 0.000000e+00 : f32
    %89 = vector.broadcast %cst_37 : f32 to vector<8x640xf32>
    %90 = arith.subf %89, %88 : vector<8x640xf32>
    %91 = math.exp %90 : vector<8x640xf32>
    %cst_38 = arith.constant 1.000000e+00 : f32
    %92 = vector.broadcast %cst_38 : f32 to vector<8x640xf32>
    %93 = arith.addf %92, %91 : vector<8x640xf32>
    %cst_39 = arith.constant 1.000000e+00 : f32
    %94 = vector.broadcast %cst_39 : f32 to vector<8x640xf32>
    %95 = arith.divf %94, %93 : vector<8x640xf32>
    %c0_40 = arith.constant 0 : index
    %c0_41 = arith.constant 0 : index
    %96 = vector.load %arg5[%c0_40, %c0_41] : memref<672x640xbf16, #tpu.memory_space<vmem>>, vector<640x640xbf16>
    %97 = arith.truncf %95 : vector<8x640xf32> to vector<8x640xbf16>
    %cst_42 = arith.constant dense<0.000000e+00> : vector<8x640xf32>
    %98 = tpu.matmul %97, %96, %cst_42 {dimension_numbers = #tpu.dot_dimension_numbers<[1], [0], [0], [1], [0, 0, 1, 1], [], []>} : vector<8x640xbf16>, vector<640x640xbf16>, vector<8x640xf32> -> vector<8x640xf32>
    %99 = vector.broadcast %81 : vector<1x640xf32> to vector<8x640xf32>
    %100 = arith.addf %98, %99 : vector<8x640xf32>
    %cst_43 = arith.constant 0.000000e+00 : f32
    %101 = vector.broadcast %cst_43 : f32 to vector<8x640xf32>
    %102 = arith.maximumf %100, %101 : vector<8x640xf32>
    %c0_44 = arith.constant 0 : index
    %c0_45 = arith.constant 0 : index
    %103 = vector.load %arg7[%c0_44, %c0_45] : memref<640x128xbf16, #tpu.memory_space<vmem>>, vector<640x128xbf16>
    %104 = arith.truncf %102 : vector<8x640xf32> to vector<8x640xbf16>
    %cst_46 = arith.constant dense<0.000000e+00> : vector<8x128xf32>
    %105 = tpu.matmul %104, %103, %cst_46 {dimension_numbers = #tpu.dot_dimension_numbers<[1], [0], [0], [1], [0, 0, 1, 1], [], []>} : vector<8x640xbf16>, vector<640x128xbf16>, vector<8x128xf32> -> vector<8x128xf32>
    %106 = vector.broadcast %82 : vector<1x128xf32> to vector<8x128xf32>
    %107 = arith.addf %105, %106 : vector<8x128xf32>
    %cst_47 = arith.constant 0.000000e+00 : f32
    %108 = vector.broadcast %cst_47 : f32 to vector<8x128xf32>
    %109 = arith.subf %108, %107 : vector<8x128xf32>
    %110 = math.exp %109 : vector<8x128xf32>
    %cst_48 = arith.constant 1.000000e+00 : f32
    %111 = vector.broadcast %cst_48 : f32 to vector<8x128xf32>
    %112 = arith.addf %111, %110 : vector<8x128xf32>
    %cst_49 = arith.constant 1.000000e+00 : f32
    %113 = vector.broadcast %cst_49 : f32 to vector<8x128xf32>
    %114 = arith.divf %113, %112 : vector<8x128xf32>
    %cst_50 = arith.constant 0.000000e+00 : f32
    %115 = vector.broadcast %cst_50 : f32 to vector<8x70xf32>
    %116 = tpu.concatenate %54, %62, %67, %71, %79, %24, %33, %45, %115 in 1 : vector<8x8xf32>, vector<8x8xf32>, vector<8x8xf32>, vector<8x8xf32>, vector<8x8xf32>, vector<8x6xf32>, vector<8x6xf32>, vector<8x6xf32>, vector<8x70xf32> -> vector<8x128xf32>
    %c0_51 = arith.constant 0 : index
    %c0_52 = arith.constant 0 : index
    %117 = vector.load %arg8[%c0_51, %c0_52] : memref<8x128xf32, #tpu.memory_space<vmem>>, vector<8x128xf32>
    tpu.vector_store %arg8[%c0_51, %c0_52], %116 {strides = array<i32>} : memref<8x128xf32, #tpu.memory_space<vmem>>, vector<8x128xf32>,
    %c0_53 = arith.constant 0 : index
    %c0_54 = arith.constant 0 : index
    %118 = vector.load %arg9[%c0_53, %c0_54] : memref<8x128xf32, #tpu.memory_space<vmem>>, vector<8x128xf32>
    tpu.vector_store %arg9[%c0_53, %c0_54], %114 {strides = array<i32>} : memref<8x128xf32, #tpu.memory_space<vmem>>, vector<8x128xf32>,
    %c0_55 = arith.constant 0 : index
    %c0_56 = arith.constant 0 : index
    %119 = vector.load %arg10[%c0_55, %c0_56] : memref<8x640xf32, #tpu.memory_space<vmem>>, vector<8x640xf32>
    tpu.vector_store %arg10[%c0_55, %c0_56], %95 {strides = array<i32>} : memref<8x640xf32, #tpu.memory_space<vmem>>, vector<8x640xf32>,
    return
  }
  func.func @transform_0(%arg0: i32) -> (i32, i32) {
    %c0_i32 = arith.constant 0 : i32
    %c0_i32_0 = arith.constant 0 : i32
    %c0_i32_1 = arith.constant 0 : i32
    return %c0_i32, %c0_i32_0 : i32, i32
  }
  func.func @transform_1(%arg0: i32) -> (i32, i32) {
    %c0_i32 = arith.constant 0 : i32
    %c0_i32_0 = arith.constant 0 : i32
    return %arg0, %c0_i32 : i32, i32
  }
  func.func @transform_2(%arg0: i32) -> (i32, i32) {
    %c0_i32 = arith.constant 0 : i32
    %c0_i32_0 = arith.constant 0 : i32
    return %arg0, %c0_i32 : i32, i32
  }
  func.func @transform_3(%arg0: i32) -> (i32, i32) {
    %c0_i32 = arith.constant 0 : i32
    %c0_i32_0 = arith.constant 0 : i32
    %c0_i32_1 = arith.constant 0 : i32
    return %c0_i32, %c0_i32_0 : i32, i32
  }
  func.func @transform_4(%arg0: i32) -> (i32, i32) {
    %c0_i32 = arith.constant 0 : i32
    %c0_i32_0 = arith.constant 0 : i32
    %c0_i32_1 = arith.constant 0 : i32
    return %c0_i32, %c0_i32_0 : i32, i32
  }
  func.func @transform_5(%arg0: i32) -> (i32, i32) {
    %c0_i32 = arith.constant 0 : i32
    %c0_i32_0 = arith.constant 0 : i32
    %c0_i32_1 = arith.constant 0 : i32
    return %c0_i32, %c0_i32_0 : i32, i32
  }
  func.func @transform_6(%arg0: i32) -> (i32, i32) {
    %c0_i32 = arith.constant 0 : i32
    %c0_i32_0 = arith.constant 0 : i32
    %c0_i32_1 = arith.constant 0 : i32
    return %c0_i32, %c0_i32_0 : i32, i32
  }
  func.func @transform_7(%arg0: i32) -> (i32, i32) {
    %c0_i32 = arith.constant 0 : i32
    %c0_i32_0 = arith.constant 0 : i32
    return %arg0, %c0_i32 : i32, i32
  }
  func.func @transform_8(%arg0: i32) -> (i32, i32) {
    %c0_i32 = arith.constant 0 : i32
    %c0_i32_0 = arith.constant 0 : i32
    return %arg0, %c0_i32 : i32, i32
  }
  func.func @transform_9(%arg0: i32) -> (i32, i32) {
    %c0_i32 = arith.constant 0 : i32
    %c0_i32_0 = arith.constant 0 : i32
    return %arg0, %c0_i32 : i32, i32
  }
}

</mosaic_0001>

<llo_original>
// kernel: tpu_custom_call.1
$region0: #{tpu_custom_call.1}
  #allocation0 [shape = 'u32[]', space=smem, size = 0x4, offset = 0x4, fixed_abs, tag = 'smem constant byte address 0x4 - core index']
  #allocation1 [shape = 'u32[72,128]{1,0:T(1,128)}', space=vmem, size = 0x9000, scoped, tag = 'internal scratch']
  #allocation2 [shape = 'f32[1,1]{1,0:T(1,128)S(6)}', space=smem, size = 0x200, scoped, tag = 'scoped memory for tpu_custom_call.1']
  %s0 = inlined_call_operand.<no memory space> [shape: f32[1,1], index: 0, kind: input, shape index: {}]
  %s1 = inlined_call_operand.hbm [shape: f32[8,128], index: 1, kind: input, shape index: {}]
  %s2 = inlined_call_operand.hbm [shape: f32[8,128], index: 2, kind: input, shape index: {}]
  %s3 = inlined_call_operand.hbm [shape: f32[280,128], index: 3, kind: input, shape index: {}]
  %s4 = inlined_call_operand.hbm [shape: bf16[672,640], index: 4, kind: input, shape index: {}]
  %s5 = inlined_call_operand.hbm [shape: f32[8,640], index: 5, kind: input, shape index: {}]
  %s6 = inlined_call_operand.hbm [shape: bf16[640,128], index: 6, kind: input, shape index: {}]
  %s7 = inlined_call_operand.hbm [shape: f32[8,128], index: 7, kind: output, shape index: {0}]
  %s8 = inlined_call_operand.hbm [shape: f32[8,128], index: 8, kind: output, shape index: {1}]
  %s9 = inlined_call_operand.hbm [shape: f32[8,640], index: 9, kind: output, shape index: {2}]
  %10 = xla_tuple %s7, %s8, %s9
  %s11 = sld [smem:[#allocation0]]
  $region78: #{tpu_custom_call.1} parent=0
    _
  %s13 = ssub.s32 1, %s11
  %s14 = scalar_select 0, %s13, %s11
  %15 = sst [smem:[#allocation2]] %s0
  $region1: #{tpu_custom_call.1} parent=0
    #allocation3 [shape = 'u8[4096]{0}', space=vmem, size = 0x1000, scoped, tag = 'input window, operand 1, single buffered']
    #allocation4 [shape = 's32[1]{0}', space=sflag, size = 0x4, scoped, tag = 'scoped memory for tpu_custom_call.1']
    #allocation5 [shape = 's32[1]{0}', space=sflag, size = 0x4, scoped, tag = 'scoped memory for tpu_custom_call.1']
    #allocation6 [shape = 'u8[4096]{0}', space=vmem, size = 0x1000, scoped, tag = 'input window, operand 2, single buffered']
    #allocation7 [shape = 's32[1]{0}', space=sflag, size = 0x4, scoped, tag = 'scoped memory for tpu_custom_call.1']
    #allocation8 [shape = 'u8[143360]{0}', space=vmem, size = 0x23000, scoped, tag = 'input window, operand 3, single buffered']
    #allocation9 [shape = 'u8[860160]{0}', space=vmem, size = 0xd2000, scoped, tag = 'input window, operand 4, single buffered']
    #allocation10 [shape = 's32[1]{0}', space=sflag, size = 0x4, scoped, tag = 'scoped memory for tpu_custom_call.1']
    #allocation11 [shape = 'u8[20480]{0}', space=vmem, size = 0x5000, scoped, tag = 'input window, operand 5, single buffered']
    #allocation12 [shape = 'u8[163840]{0}', space=vmem, size = 0x28000, scoped, tag = 'input window, operand 6, single buffered']
    #allocation13 [shape = 's32[1]{0}', space=sflag, size = 0x4, scoped, tag = 'scoped memory for tpu_custom_call.1']
    #allocation14 [shape = 'u8[4096]{0}', space=vmem, size = 0x1000, scoped, tag = 'output window, operand 0, single buffered']
    #allocation15 [shape = 'u8[4096]{0}', space=vmem, size = 0x1000, scoped, tag = 'output window, operand 1, single buffered']
    #allocation16 [shape = 's32[1]{0}', space=sflag, size = 0x4, scoped, tag = 'scoped memory for tpu_custom_call.1']
    #allocation17 [shape = 'u8[20480]{0}', space=vmem, size = 0x5000, scoped, tag = 'output window, operand 2, single buffered']
    %16 = vsyncpa [#allocation4], 0
    %17 = vsyncpa [#allocation7], 0
    %18 = vsyncpa [#allocation10], 0
    %19 = vsyncpa [#allocation13], 0
    %20 = vsyncpa [#allocation5], 0
    %21 = vsyncpa [#allocation16], 0
    // Predicated region
    $region2: #{tpu_custom_call.1} parent=1 // pred_check
      _
    $region3: #{tpu_custom_call.1} parent=1 // pred_check_branch
      %23 = sbr.rel (0) target = $region5
    $region4: #{tpu_custom_call.1} parent=1 // pred_region
      _
    $region5: #{tpu_custom_call.1} parent=1 // pred_fallthru
      _
    // Predicated region
    $region6: #{tpu_custom_call.1} parent=1 // pred_check
      _
    $region7: #{tpu_custom_call.1} parent=1 // pred_check_branch
      %25 = sbr.rel (0) target = $region9
    $region8: #{tpu_custom_call.1} parent=1 // pred_region
      %27 = vsyncadd [#allocation4], 0
      %s29 = sshll.u32 %s1, 4
      %s30 = int_to_ptr.hbm [resolvable:$true] %s29
      %s31 = sshll.u32 [#allocation3], 4
      %s32 = int_to_ptr.vmem [resolvable:$true] %s31
      %34 = dma.hbm_to_vmem [thread:$0]  %s30, 128, %s32, [#allocation4]
    $region9: #{tpu_custom_call.1} parent=1 // pred_fallthru
      _
    // Predicated region
    $region10: #{tpu_custom_call.1} parent=1 // pred_check
      _
    $region11: #{tpu_custom_call.1} parent=1 // pred_check_branch
      %36 = sbr.rel (0) target = $region13
    $region12: #{tpu_custom_call.1} parent=1 // pred_region
      %38 = vsyncadd [#allocation7], 0
      %s40 = sshll.u32 %s2, 4
      %s41 = int_to_ptr.hbm [resolvable:$true] %s40
      %s42 = sshll.u32 [#allocation6], 4
      %s43 = int_to_ptr.vmem [resolvable:$true] %s42
      %45 = dma.hbm_to_vmem [thread:$0]  %s41, 128, %s43, [#allocation7]
    $region13: #{tpu_custom_call.1} parent=1 // pred_fallthru
      _
    // Predicated region
    $region14: #{tpu_custom_call.1} parent=1 // pred_check
      _
    $region15: #{tpu_custom_call.1} parent=1 // pred_check_branch
      %47 = sbr.rel (0) target = $region17
    $region16: #{tpu_custom_call.1} parent=1 // pred_region
      %49 = vsyncadd [#allocation7], 0
      %s50 = sshll.u32 %s3, 4
      %s51 = int_to_ptr.hbm [resolvable:$true] %s50
      %s52 = sshll.u32 [#allocation8], 4
      %s53 = int_to_ptr.vmem [resolvable:$true] %s52
      %58 = dma.hbm_to_vmem [thread:$0]  %s51, 4480, %s53, [#allocation7], 128, 128, 8
    $region17: #{tpu_custom_call.1} parent=1 // pred_fallthru
      _
    // Predicated region
    $region18: #{tpu_custom_call.1} parent=1 // pred_check
      _
    $region19: #{tpu_custom_call.1} parent=1 // pred_check_branch
      %60 = sbr.rel (0) target = $region21
    $region20: #{tpu_custom_call.1} parent=1 // pred_region
      %62 = vsyncadd [#allocation10], 0
      %s63 = sshll.u32 %s4, 4
      %s64 = int_to_ptr.hbm [resolvable:$true] %s63
      %s65 = sshll.u32 [#allocation9], 4
      %s66 = int_to_ptr.vmem [resolvable:$true] %s65
      %71 = dma.hbm_to_vmem [thread:$0]  %s64, 26880, %s66, [#allocation10], 320, 320, 20
    $region21: #{tpu_custom_call.1} parent=1 // pred_fallthru
      _
    // Predicated region
    $region22: #{tpu_custom_call.1} parent=1 // pred_check
      _
    $region23: #{tpu_custom_call.1} parent=1 // pred_check_branch
      %73 = sbr.rel (0) target = $region25
    $region24: #{tpu_custom_call.1} parent=1 // pred_region
      %75 = vsyncadd [#allocation10], 0
      %s77 = sshll.u32 %s5, 4
      %s78 = int_to_ptr.hbm [resolvable:$true] %s77
      %s79 = sshll.u32 [#allocation11], 4
      %s80 = int_to_ptr.vmem [resolvable:$true] %s79
      %82 = dma.hbm_to_vmem [thread:$0]  %s78, 640, %s80, [#allocation10]
    $region25: #{tpu_custom_call.1} parent=1 // pred_fallthru
      _
    // Predicated region
    $region26: #{tpu_custom_call.1} parent=1 // pred_check
      _
    $region27: #{tpu_custom_call.1} parent=1 // pred_check_branch
      %84 = sbr.rel (0) target = $region29
    $region28: #{tpu_custom_call.1} parent=1 // pred_region
      %86 = vsyncadd [#allocation13], 0
      %s87 = sshll.u32 %s6, 4
      %s88 = int_to_ptr.hbm [resolvable:$true] %s87
      %s89 = sshll.u32 [#allocation12], 4
      %s90 = int_to_ptr.vmem [resolvable:$true] %s89
      %95 = dma.hbm_to_vmem [thread:$0]  %s88, 5120, %s90, [#allocation13], 64, 64, 4
    $region29: #{tpu_custom_call.1} parent=1 // pred_fallthru
      _
    // Predicated region
    $region30: #{tpu_custom_call.1} parent=1 // pred_check
      _
    $region31: #{tpu_custom_call.1} parent=1 // pred_check_branch
      %97 = sbr.rel (0) target = $region33
    $region32: #{tpu_custom_call.1} parent=1 // pred_region
      %99 = dma.done [#allocation4], 128
    $region33: #{tpu_custom_call.1} parent=1 // pred_fallthru
      _
    // Predicated region
    $region34: #{tpu_custom_call.1} parent=1 // pred_check
      _
    $region35: #{tpu_custom_call.1} parent=1 // pred_check_branch
      %101 = sbr.rel (0) target = $region37
    $region36: #{tpu_custom_call.1} parent=1 // pred_region
      %103 = dma.done [#allocation7], 128
    $region37: #{tpu_custom_call.1} parent=1 // pred_fallthru
      _
    // Predicated region
    $region38: #{tpu_custom_call.1} parent=1 // pred_check
      _
    $region39: #{tpu_custom_call.1} parent=1 // pred_check_branch
      %105 = sbr.rel (0) target = $region41
    $region40: #{tpu_custom_call.1} parent=1 // pred_region
      %107 = dma.done [#allocation7], 4480
    $region41: #{tpu_custom_call.1} parent=1 // pred_fallthru
      _
    // Predicated region
    $region42: #{tpu_custom_call.1} parent=1 // pred_check
      _
    $region43: #{tpu_custom_call.1} parent=1 // pred_check_branch
      %109 = sbr.rel (0) target = $region45
    $region44: #{tpu_custom_call.1} parent=1 // pred_region
      %111 = dma.done [#allocation10], 26880
    $region45: #{tpu_custom_call.1} parent=1 // pred_fallthru
      _
    // Predicated region
    $region46: #{tpu_custom_call.1} parent=1 // pred_check
      _
    $region47: #{tpu_custom_call.1} parent=1 // pred_check_branch
      %113 = sbr.rel (0) target = $region49
    $region48: #{tpu_custom_call.1} parent=1 // pred_region
      %115 = dma.done [#allocation10], 640
    $region49: #{tpu_custom_call.1} parent=1 // pred_fallthru
      _
    // Predicated region
    $region50: #{tpu_custom_call.1} parent=1 // pred_check
      _
    $region51: #{tpu_custom_call.1} parent=1 // pred_check_branch
      %117 = sbr.rel (0) target = $region53
    $region52: #{tpu_custom_call.1} parent=1 // pred_region
      %119 = dma.done [#allocation13], 5120
    $region53: #{tpu_custom_call.1} parent=1 // pred_fallthru
      _
    %v121 = vld [vmem:[#allocation3] sm:$0xff]
    %v122 = vld [vmem:[#allocation6] sm:$0xff]
    %s123 = sld [smem:[#allocation2]]
    %v124 = vstv %s123
    %v125 = vrcp.pop %v124
    %v126 = vmul.f32 %v124, %v125
    %v127 = vsub.f32 1.0, %v126
    %v128 = vmul.f32 %v125, %v127
    %v129 = vadd.f32 %v125, %v128
    %vm130 = vweird.f32 %v124
    %vm131 = vweird.f32 %v125
    %vm132 = vmor %vm130, %vm131
    %v133 = vsel %vm132, %v125, %v129
    %v134 = vand.u32 2147483647, %v124
    %vm135 = vcmp.eq.f32.partialorder %v134, 8.507059e+37
    %v136 = vand.u32 %v124, 2147483648
    %v137 = vor.u32 1.1754944e-38, %v136
    %v138 = vsel %vm135, %v137, %v133
    %s139 = vtos %v138
    %v140 = vld [vmem:[#allocation8] sm:$0xff]
    %v141 = vld [vmem:[#allocation8 + $0x8] sm:$0xff]
    %v142 = vld [vmem:[#allocation8 + $0x10] sm:$0xff]
    %v143 = vld [vmem:[#allocation8 + $0x18] sm:$0xff]
    %v144 = vld [vmem:[#allocation8 + $0x20] sm:$0xff]
    %v145 = vld [vmem:[#allocation8 + $0x28] sm:$0xff]
    %v146 = vld [vmem:[#allocation8 + $0x30] sm:$0xff]
    %v147 = vld [vmem:[#allocation8 + $0x38] sm:$0xff]
    %v148 = vld [vmem:[#allocation8 + $0x40] sm:$0xff]
    %v149 = vld [vmem:[#allocation8 + $0x48] sm:$0xff]
    %v150 = vld [vmem:[#allocation8 + $0x50] sm:$0xff]
    %v151 = vld [vmem:[#allocation8 + $0x58] sm:$0xff]
    %v152 = vld [vmem:[#allocation8 + $0x60] sm:$0xff]
    %v153 = vld [vmem:[#allocation8 + $0x68] sm:$0xff]
    %v154 = vld [vmem:[#allocation8 + $0x70] sm:$0xff]
    %v155 = vld [vmem:[#allocation8 + $0x78] sm:$0xff]
    %v156 = vld [vmem:[#allocation8 + $0x80] sm:$0x3f]
    %v157 = vld [vmem:[#allocation8 + $0x88] sm:$0xff]
    %v158 = vld [vmem:[#allocation8 + $0x90] sm:$0xff]
    %v159 = vld [vmem:[#allocation8 + $0x98] sm:$0xff]
    %v160 = vld [vmem:[#allocation8 + $0xa0] sm:$0xff]
    %v161 = vld [vmem:[#allocation8 + $0xa8] sm:$0xff]
    %v162 = vld [vmem:[#allocation8 + $0xb0] sm:$0xff]
    %v163 = vld [vmem:[#allocation8 + $0xb8] sm:$0xff]
    %v164 = vld [vmem:[#allocation8 + $0xc0] sm:$0xff]
    %v165 = vld [vmem:[#allocation8 + $0xc8] sm:$0xff]
    %v166 = vld [vmem:[#allocation8 + $0xd0] sm:$0xff]
    %v167 = vld [vmem:[#allocation8 + $0xd8] sm:$0xff]
    %v168 = vld [vmem:[#allocation8 + $0xe0] sm:$0xff]
    %v169 = vld [vmem:[#allocation8 + $0xe8] sm:$0xff]
    %v170 = vld [vmem:[#allocation8 + $0xf0] sm:$0xff]
    %v171 = vld [vmem:[#allocation8 + $0xf8] sm:$0xff]
    %v172 = vld [vmem:[#allocation8 + $0x100] sm:$0xff]
    %v173 = vld [vmem:[#allocation8 + $0x108] sm:$0x3f]
    %v174 = vld [vmem:[#allocation8 + $0x110] sm:$0x1]
    %v175 = vld [vmem:[#allocation8 + $0x111] sm:$0x1]
    %v176 = vld [vmem:[#allocation8 + $0x112] sm:$0x1]
    %v177 = vld [vmem:[#allocation8 + $0x113] sm:$0x1]
    %v178 = vperm.slane %v174, 0
    %179 = vmatpush.msra.mxu0 %v155
    %180 = vmatpush.msra.mxu0 %v154
    %181 = vmatpush.msra.mxu0 %v153
    %182 = vmatpush.msra.mxu0 %v152
    %183 = vmatpush.msra.mxu0 %v151
    %184 = vmatpush.msra.mxu0 %v150
    %185 = vmatpush.msra.mxu0 %v149
    %186 = vmatpush.msra.mxu0 %v148
    %187 = vmatpush.msra.mxu0 %v147
    %188 = vmatpush.msra.mxu0 %v146
    %189 = vmatpush.msra.mxu0 %v145
    %190 = vmatpush.msra.mxu0 %v144
    %191 = vmatpush.msra.mxu0 %v143
    %192 = vmatpush.msra.mxu0 %v142
    %193 = vmatpush.msra.mxu0 %v141
    %194 = vmatpush.msra.mxu0 %v140
    %195 = vmatmul.f32.gmra.mxu0 %v121
    %v196 = vpop.f32.mrf.mxu0
    %v197 = vadd.f32 %v178, %v196
    %198 = vdwg.mxu0
    %v199 = vmax.f32 %v197, 0.0
    %v200 = vperm.slane %v175, 0
    %vm201 = vcmask 523264
    %v203 = vsel %vm201, %v199, 0
    %205 = vmatpush.msra.mxu0 0.0
    %206 = vmatpush.msra.mxu0 0.0
    %207 = vmatpush.msra.mxu0 0.0
    %208 = vmatpush.msra.mxu0 0.0
    %209 = vmatpush.msra.mxu0 0.0
    %210 = vmatpush.msra.mxu0 0.0
    %211 = vmatpush.msra.mxu0 0.0
    %212 = vmatpush.msra.mxu0 0.0
    %213 = vmatpush.msra.mxu0 %v164
    %214 = vmatpush.msra.mxu0 %v163
    %215 = vmatpush.msra.mxu0 %v162
    %216 = vmatpush.msra.mxu0 %v161
    %217 = vmatpush.msra.mxu0 %v160
    %218 = vmatpush.msra.mxu0 %v159
    %219 = vmatpush.msra.mxu0 %v158
    %220 = vmatpush.msra.mxu0 %v157
    %221 = vmatmul.f32.gmra.mxu0 %v203
    %v222 = vpop.f32.mrf.mxu0
    %v223 = vadd.f32 %v200, %v222
    %224 = vdwg.mxu0
    %vm225 = vcmask 48128
    %v226 = vsel %vm225, %v223, -inf
    %227 = vmax.xlane.f32.xlu0 %v226
    %v228 = vpop.xlane.xlu0 %227
    %v229 = vsub.f32 %v223, %v228
    %v230 = vmul.f32 %v229, 1.442695
    %v231 = vpow.pop %v230
    %v232 = vsel %vm225, %v231, 0.0
    %233 = vadd.xlane.f32.xlu0 %v232
    %v234 = vpop.xlane.xlu0 %233
    %v235 = vrcp.pop %v234
    %v236 = vmul.f32 %v234, %v235
    %v237 = vsub.f32 1.0, %v236
    %v238 = vmul.f32 %v235, %v237
    %v239 = vadd.f32 %v235, %v238
    %vm240 = vweird.f32 %v234
    %vm241 = vweird.f32 %v235
    %vm242 = vmor %vm240, %vm241
    %v243 = vsel %vm242, %v235, %v239
    %v244 = vand.u32 2147483647, %v234
    %vm245 = vcmp.eq.f32.partialorder %v244, 8.507059e+37
    %v246 = vand.u32 %v234, 2147483648
    %v247 = vor.u32 1.1754944e-38, %v246
    %v248 = vsel %vm245, %v247, %v243
    %v249 = vmul.f32 %v231, %v248
    %251 = vrot.lane.b32.xlu0 %v122, 112
    %v252 = vpop.permute.xlu0 %251
    %v254 = vadd.f32 %v223, %v252
    %v255 = vstv %s139
    %v256 = vmul.f32 %v254, %v255
    %v257 = vsel %vm225, %v256, -inf
    %258 = vmax.xlane.f32.xlu0 %v257
    %v259 = vpop.xlane.xlu0 %258
    %v260 = vsub.f32 %v256, %v259
    %v261 = vmul.f32 %v260, 1.442695
    %v262 = vpow.pop %v261
    %v263 = vsel %vm225, %v262, 0.0
    %264 = vadd.xlane.f32.xlu0 %v263
    %v265 = vpop.xlane.xlu0 %264
    %v266 = vrcp.pop %v265
    %v267 = vmul.f32 %v265, %v266
    %v268 = vsub.f32 1.0, %v267
    %v269 = vmul.f32 %v266, %v268
    %v270 = vadd.f32 %v266, %v269
    %vm271 = vweird.f32 %v265
    %vm272 = vweird.f32 %v266
    %vm273 = vmor %vm271, %vm272
    %v274 = vsel %vm273, %v266, %v270
    %v275 = vand.u32 2147483647, %v265
    %vm276 = vcmp.eq.f32.partialorder %v275, 8.507059e+37
    %v277 = vand.u32 %v265, 2147483648
    %v278 = vor.u32 1.1754944e-38, %v277
    %v279 = vsel %vm276, %v278, %v274
    %v280 = vmul.f32 %v262, %v279
    %v282 = vsel %vm225, %v280, 0
    %vm284 = vcmask 1045504
    %v286 = vsel %vm284, %v156, 0
    %288 = vmatpush.msra.mxu0 0.0
    %289 = vmatpush.msra.mxu0 0.0
    %290 = vmatpush.msra.mxu0 0.0
    %291 = vmatpush.msra.mxu0 0.0
    %292 = vmatpush.msra.mxu0 0.0
    %293 = vmatpush.msra.mxu0 0.0
    %294 = vmatpush.msra.mxu0 0.0
    %295 = vmatpush.msra.mxu0 0.0
    %296 = vmatpush.msra.mxu0 0.0
    %297 = vmatpush.msra.mxu0 0.0
    %298 = vmatpush.msra.mxu0 0.0
    %299 = vmatpush.msra.mxu0 0.0
    %300 = vmatpush.msra.mxu0 0.0
    %301 = vmatpush.msra.mxu0 0.0
    %302 = vmatpush.msra.mxu0 0.0
    %303 = vmatpush.msra.mxu0 %v286
    %304 = vmatmul.f32.gmra.mxu0 %v282
    %v305 = vpop.f32.mrf.mxu0
    %v306 = vadd.f32 0.0, %v305
    %307 = vdwg.mxu0
    %309 = vrot.lane.b32.xlu0 %v306, 64
    %v310 = vpop.permute.xlu0 %309
    %v312 = vadd.f32 %v197, %v310
    %v313 = vmax.f32 %v312, 0.0
    %v314 = vperm.slane %v176, 0
    %316 = vrot.lane.b32.xlu0 %v313, 64
    %v317 = vpop.permute.xlu0 %316
    %v318 = vsel %vm201, %v317, 0
    %320 = vmatpush.msra.mxu0 0.0
    %321 = vmatpush.msra.mxu0 0.0
    %322 = vmatpush.msra.mxu0 0.0
    %323 = vmatpush.msra.mxu0 0.0
    %324 = vmatpush.msra.mxu0 0.0
    %325 = vmatpush.msra.mxu0 0.0
    %326 = vmatpush.msra.mxu0 0.0
    %327 = vmatpush.msra.mxu0 0.0
    %328 = vmatpush.msra.mxu0 %v172
    %329 = vmatpush.msra.mxu0 %v171
    %330 = vmatpush.msra.mxu0 %v170
    %331 = vmatpush.msra.mxu0 %v169
    %332 = vmatpush.msra.mxu0 %v168
    %333 = vmatpush.msra.mxu0 %v167
    %334 = vmatpush.msra.mxu0 %v166
    %335 = vmatpush.msra.mxu0 %v165
    %336 = vmatmul.f32.gmra.mxu0 %v318
    %v337 = vpop.f32.mrf.mxu0
    %v338 = vadd.f32 %v314, %v337
    %339 = vdwg.mxu0
    %vm340 = vcmp.gt.f32.partialorder %v338, 20.0
    %v341 = vmin.f32 %v338, 20.0
    %v342 = vmul.f32 %v341, 1.442695
    %v343 = vpow.pop %v342
    %v344 = vadd.f32 %v343, 1.0
    %v345 = vlog2.pop %v344
    %v346 = vmul.f32 %v345, 0.6931472
    %v347 = vmul.f32 -0.5, %v343
    %v348 = vadd.f32 %v347, 1.0
    %v349 = vmul.f32 %v348, %v343
    %v350 = vand.u32 2147483647, %v343
    %vm351 = vcmp.lt.f32.partialorder %v350, 0.0004427343
    %v352 = vsel %vm351, %v349, %v346
    %v353 = vsel %vm340, %v338, %v352
    %v354 = vadd.f32 %v353, 1e-10
    %v355 = vrsqrt.pop %v354
    %v356 = vmul.f32 %v355, %v354
    %v357 = vmul.f32 %v356, %v355
    %v358 = vmul.f32 0.5, %v357
    %v359 = vsub.f32 1.5, %v358
    %v360 = vmul.f32 %v355, %v359
    %v361 = vmul.f32 %v354, %v360
    %vm362 = vcmp.eq.f32.partialorder %v354, inf
    %v363 = vsel %vm362, %v354, %v361
    %vm364 = vcmp.eq.f32.partialorder %v354, 0.0
    %v365 = vand.u32 %v354, 2147483648
    %v366 = vsel %vm364, %v365, %v363
    %368 = vrot.lane.b32.xlu0 %v366, 14
    %v369 = vpop.permute.xlu0 %368
    %v371 = vmul.f32 %v122, %v369
    %373 = vrot.lane.b32.xlu0 %v371, 106
    %v374 = vpop.permute.xlu0 %373
    %v376 = vadd.f32 %v338, %v374
    %v377 = vperm.slane %v177, 0
    %v379 = vsel %vm284, %v173, 0
    %381 = vmatpush.msra.mxu0 0.0
    %382 = vmatpush.msra.mxu0 0.0
    %383 = vmatpush.msra.mxu0 0.0
    %384 = vmatpush.msra.mxu0 0.0
    %385 = vmatpush.msra.mxu0 0.0
    %386 = vmatpush.msra.mxu0 0.0
    %387 = vmatpush.msra.mxu0 0.0
    %388 = vmatpush.msra.mxu0 0.0
    %389 = vmatpush.msra.mxu0 0.0
    %390 = vmatpush.msra.mxu0 0.0
    %391 = vmatpush.msra.mxu0 0.0
    %392 = vmatpush.msra.mxu0 0.0
    %393 = vmatpush.msra.mxu0 0.0
    %394 = vmatpush.msra.mxu0 0.0
    %395 = vmatpush.msra.mxu0 0.0
    %396 = vmatpush.msra.mxu0 %v379
    %397 = vmatmul.f32.gmra.mxu0 %v282
    %v398 = vpop.f32.mrf.mxu0
    %v399 = vadd.f32 %v377, %v398
    %400 = vdwg.mxu0
    %vm401 = vcmp.gt.f32.partialorder %v399, 20.0
    %v402 = vmin.f32 %v399, 20.0
    %v403 = vmul.f32 %v402, 1.442695
    %v404 = vpow.pop %v403
    %v405 = vadd.f32 %v404, 1.0
    %v406 = vlog2.pop %v405
    %v407 = vmul.f32 %v406, 0.6931472
    %v408 = vmul.f32 -0.5, %v404
    %v409 = vadd.f32 %v408, 1.0
    %v410 = vmul.f32 %v409, %v404
    %v411 = vand.u32 2147483647, %v404
    %vm412 = vcmp.lt.f32.partialorder %v411, 0.0004427343
    %v413 = vsel %vm412, %v410, %v407
    %v414 = vsel %vm401, %v399, %v413
    %v415 = vld [vmem:[#allocation11] ss:$8 sm:$0xf]
    %v416 = vld [vmem:[#allocation11] ss:$8 sm:$0x10]
    %v417 = vor.u32 %v415, %v416
    %s418 = scalar_lea.vmem [#allocation11], 1
    %v419 = vld [vmem:[%s418] ss:$8 sm:$0xf]
    %v420 = vld [vmem:[%s418] ss:$8 sm:$0x10]
    %v421 = vor.u32 %v419, %v420
    %v422 = vld [vmem:[#allocation11 + $0x2] ss:$0 sm:$0xff]
    %423 = vrot.lane.b32.xlu0 %v122, 8
    %v424 = vpop.permute.xlu0 %423
    %vm426 = vcmask 64512
    %v427 = vsel %vm426, %v376, %v424
    %v428 = vpack.c.bf16 %v427, %v427
    %v429 = vld [vmem:[#allocation9 + $0x640] sm:$0xff]
    %v430 = vld [vmem:[#allocation9 + $0x648] sm:$0xff]
    %v431 = vld [vmem:[#allocation9 + $0x650] sm:$0xf]
    %v432 = vld [vmem:[#allocation9 + $0x654] sm:$0xff]
    %v433 = vld [vmem:[#allocation9 + $0x65c] sm:$0xff]
    %v434 = vld [vmem:[#allocation9 + $0x664] sm:$0xf]
    %v435 = vld [vmem:[#allocation9 + $0x668] sm:$0xff]
    %v436 = vld [vmem:[#allocation9 + $0x670] sm:$0xff]
    %v437 = vld [vmem:[#allocation9 + $0x678] sm:$0xf]
    %v439 = vperm.slane %v417, 0
    %v440 = vperm.slane %v417, 1
    %v441 = vperm.slane %v417, 2
    %v442 = vperm.slane %v417, 3
    %v443 = vperm.slane %v417, 4
    %v458 = vunpack.c.l.b16 %v429
    %v459 = vunpack.c.h.b16 %v429
    %v460 = vunpack.c.l.b16 %v430
    %v461 = vunpack.c.h.b16 %v430
    %v462 = vunpack.c.l.b16 %v431
    %v463 = vunpack.c.l.b16 %v432
    %v464 = vunpack.c.h.b16 %v432
    %v465 = vunpack.c.l.b16 %v433
    %v466 = vunpack.c.h.b16 %v433
    %v467 = vunpack.c.l.b16 %v434
    %v468 = vunpack.c.l.b16 %v435
    %v469 = vunpack.c.h.b16 %v435
    %v470 = vunpack.c.l.b16 %v436
    %v471 = vunpack.c.h.b16 %v436
    %v472 = vunpack.c.l.b16 %v437
    %v473 = vpack.c.b16 %v463, %v458
    %v474 = vpack.c.b16 %v464, %v459
    %v475 = vpack.c.b16 %v465, %v460
    %v476 = vpack.c.b16 %v466, %v461
    %v477 = vpack.c.b16 %v467, %v462
    %v478 = vpack.c.b16 %v468, %v468
    %v479 = vpack.c.b16 %v469, %v469
    %v480 = vpack.c.b16 %v470, %v470
    %v481 = vpack.c.b16 %v471, %v471
    %v482 = vpack.c.b16 %v472, %v472
    %vm488 = vcmask 195584
    %v490 = vsel %vm488, %v428, 0
    %vm492 = vcmask 1043456
    %v494 = vsel %vm492, %v478, 0
    %v497 = vsel %vm492, %v479, 0
    %v500 = vsel %vm492, %v480, 0
    %v503 = vsel %vm492, %v481, 0
    %v506 = vsel %vm492, %v482, 0
    %508 = vmatpush.bf16.msra.mxu0 0
    %509 = vmatpush.bf16.msra.mxu0 0
    %510 = vmatpush.bf16.msra.mxu0 0
    %511 = vmatpush.bf16.msra.mxu0 0
    %512 = vmatpush.bf16.msra.mxu0 0
    %513 = vmatpush.bf16.msra.mxu0 0
    %514 = vmatpush.bf16.msra.mxu0 %v494
    %515 = vmatpush.bf16.msra.mxu0 %v473
    %516 = vmatmul.bf16.gmra.mxu0 %v490
    %v517 = vpop.f32.mrf.mxu0
    %v518 = vadd.f32 %v439, %v517
    %v519 = vpop.f32.mrf.mxu0
    %520 = vdwg.mxu0
    %521 = vmatpush.bf16.msra.mxu0 0
    %522 = vmatpush.bf16.msra.mxu0 0
    %523 = vmatpush.bf16.msra.mxu0 0
    %524 = vmatpush.bf16.msra.mxu0 0
    %525 = vmatpush.bf16.msra.mxu0 0
    %526 = vmatpush.bf16.msra.mxu0 0
    %527 = vmatpush.bf16.msra.mxu0 %v497
    %528 = vmatpush.bf16.msra.mxu0 %v474
    %529 = vmatmul.bf16.gmra.mxu0 %v490
    %v530 = vpop.f32.mrf.mxu0
    %v531 = vadd.f32 %v440, %v530
    %v532 = vpop.f32.mrf.mxu0
    %533 = vdwg.mxu0
    %534 = vmatpush.bf16.msra.mxu0 0
    %535 = vmatpush.bf16.msra.mxu0 0
    %536 = vmatpush.bf16.msra.mxu0 0
    %537 = vmatpush.bf16.msra.mxu0 0
    %538 = vmatpush.bf16.msra.mxu0 0
    %539 = vmatpush.bf16.msra.mxu0 0
    %540 = vmatpush.bf16.msra.mxu0 %v500
    %541 = vmatpush.bf16.msra.mxu0 %v475
    %542 = vmatmul.bf16.gmra.mxu0 %v490
    %v543 = vpop.f32.mrf.mxu0
    %v544 = vadd.f32 %v441, %v543
    %v545 = vpop.f32.mrf.mxu0
    %546 = vdwg.mxu0
    %547 = vmatpush.bf16.msra.mxu0 0
    %548 = vmatpush.bf16.msra.mxu0 0
    %549 = vmatpush.bf16.msra.mxu0 0
    %550 = vmatpush.bf16.msra.mxu0 0
    %551 = vmatpush.bf16.msra.mxu0 0
    %552 = vmatpush.bf16.msra.mxu0 0
    %553 = vmatpush.bf16.msra.mxu0 %v503
    %554 = vmatpush.bf16.msra.mxu0 %v476
    %555 = vmatmul.bf16.gmra.mxu0 %v490
    %v556 = vpop.f32.mrf.mxu0
    %v557 = vadd.f32 %v442, %v556
    %v558 = vpop.f32.mrf.mxu0
    %559 = vdwg.mxu0
    %560 = vmatpush.bf16.msra.mxu0 0
    %561 = vmatpush.bf16.msra.mxu0 0
    %562 = vmatpush.bf16.msra.mxu0 0
    %563 = vmatpush.bf16.msra.mxu0 0
    %564 = vmatpush.bf16.msra.mxu0 0
    %565 = vmatpush.bf16.msra.mxu0 0
    %566 = vmatpush.bf16.msra.mxu0 %v506
    %567 = vmatpush.bf16.msra.mxu0 %v477
    %568 = vmatmul.bf16.gmra.mxu0 %v490
    %v569 = vpop.f32.mrf.mxu0
    %v570 = vadd.f32 %v443, %v569
    %v571 = vpop.f32.mrf.mxu0
    %572 = vdwg.mxu0
    %v573 = vsub.f32 0.0, %v518
    %v574 = vsub.f32 0.0, %v531
    %v575 = vsub.f32 0.0, %v544
    %v576 = vsub.f32 0.0, %v557
    %v577 = vsub.f32 0.0, %v570
    %v578 = vmul.f32 %v573, 1.442695
    %v579 = vpow.pop %v578
    %v580 = vmul.f32 %v574, 1.442695
    %v581 = vpow.pop %v580
    %v582 = vmul.f32 %v575, 1.442695
    %v583 = vpow.pop %v582
    %v584 = vmul.f32 %v576, 1.442695
    %v585 = vpow.pop %v584
    %v586 = vmul.f32 %v577, 1.442695
    %v587 = vpow.pop %v586
    %v588 = vadd.f32 %v579, 1.0
    %v589 = vadd.f32 %v581, 1.0
    %v590 = vadd.f32 %v583, 1.0
    %v591 = vadd.f32 %v585, 1.0
    %v592 = vadd.f32 %v587, 1.0
    %v593 = vrcp.pop %v588
    %v594 = vmul.f32 %v588, %v593
    %v595 = vsub.f32 1.0, %v594
    %v596 = vmul.f32 %v593, %v595
    %v597 = vadd.f32 %v593, %v596
    %vm598 = vweird.f32 %v588
    %vm599 = vweird.f32 %v593
    %vm600 = vmor %vm598, %vm599
    %v601 = vsel %vm600, %v593, %v597
    %v602 = vand.u32 2147483647, %v588
    %vm603 = vcmp.eq.f32.partialorder %v602, 8.507059e+37
    %v604 = vand.u32 %v588, 2147483648
    %v605 = vor.u32 1.1754944e-38, %v604
    %v606 = vsel %vm603, %v605, %v601
    %v607 = vmul.f32 1.0, %v606
    %v608 = vrcp.pop %v589
    %v609 = vmul.f32 %v589, %v608
    %v610 = vsub.f32 1.0, %v609
    %v611 = vmul.f32 %v608, %v610
    %v612 = vadd.f32 %v608, %v611
    %vm613 = vweird.f32 %v589
    %vm614 = vweird.f32 %v608
    %vm615 = vmor %vm613, %vm614
    %v616 = vsel %vm615, %v608, %v612
    %v617 = vand.u32 2147483647, %v589
    %vm618 = vcmp.eq.f32.partialorder %v617, 8.507059e+37
    %v619 = vand.u32 %v589, 2147483648
    %v620 = vor.u32 1.1754944e-38, %v619
    %v621 = vsel %vm618, %v620, %v616
    %v622 = vmul.f32 1.0, %v621
    %v623 = vrcp.pop %v590
    %v624 = vmul.f32 %v590, %v623
    %v625 = vsub.f32 1.0, %v624
    %v626 = vmul.f32 %v623, %v625
    %v627 = vadd.f32 %v623, %v626
    %vm628 = vweird.f32 %v590
    %vm629 = vweird.f32 %v623
    %vm630 = vmor %vm628, %vm629
    %v631 = vsel %vm630, %v623, %v627
    %v632 = vand.u32 2147483647, %v590
    %vm633 = vcmp.eq.f32.partialorder %v632, 8.507059e+37
    %v634 = vand.u32 %v590, 2147483648
    %v635 = vor.u32 1.1754944e-38, %v634
    %v636 = vsel %vm633, %v635, %v631
    %v637 = vmul.f32 1.0, %v636
    %v638 = vrcp.pop %v591
    %v639 = vmul.f32 %v591, %v638
    %v640 = vsub.f32 1.0, %v639
    %v641 = vmul.f32 %v638, %v640
    %v642 = vadd.f32 %v638, %v641
    %vm643 = vweird.f32 %v591
    %vm644 = vweird.f32 %v638
    %vm645 = vmor %vm643, %vm644
    %v646 = vsel %vm645, %v638, %v642
    %v647 = vand.u32 2147483647, %v591
    %vm648 = vcmp.eq.f32.partialorder %v647, 8.507059e+37
    %v649 = vand.u32 %v591, 2147483648
    %v650 = vor.u32 1.1754944e-38, %v649
    %v651 = vsel %vm648, %v650, %v646
    %v652 = vmul.f32 1.0, %v651
    %v653 = vrcp.pop %v592
    %v654 = vmul.f32 %v592, %v653
    %v655 = vsub.f32 1.0, %v654
    %v656 = vmul.f32 %v653, %v655
    %v657 = vadd.f32 %v653, %v656
    %vm658 = vweird.f32 %v592
    %vm659 = vweird.f32 %v653
    %vm660 = vmor %vm658, %vm659
    %v661 = vsel %vm660, %v653, %v657
    %v662 = vand.u32 2147483647, %v592
    %vm663 = vcmp.eq.f32.partialorder %v662, 8.507059e+37
    %v664 = vand.u32 %v592, 2147483648
    %v665 = vor.u32 1.1754944e-38, %v664
    %v666 = vsel %vm663, %v665, %v661
    %v667 = vmul.f32 1.0, %v666
    %v668 = vld [vmem:[#allocation9] sm:$0xff]
    %v669 = vld [vmem:[#allocation9 + $0x8] sm:$0xff]
    %v670 = vld [vmem:[#allocation9 + $0x10] sm:$0xf]
    %v671 = vld [vmem:[#allocation9 + $0x14] sm:$0xff]
    %v672 = vld [vmem:[#allocation9 + $0x1c] sm:$0xff]
    %v673 = vld [vmem:[#allocation9 + $0x24] sm:$0xf]
    %v674 = vld [vmem:[#allocation9 + $0x28] sm:$0xff]
    %v675 = vld [vmem:[#allocation9 + $0x30] sm:$0xff]
    %v676 = vld [vmem:[#allocation9 + $0x38] sm:$0xf]
    %v677 = vld [vmem:[#allocation9 + $0x3c] sm:$0xff]
    %v678 = vld [vmem:[#allocation9 + $0x44] sm:$0xff]
    %v679 = vld [vmem:[#allocation9 + $0x4c] sm:$0xf]
    %v680 = vld [vmem:[#allocation9 + $0x50] sm:$0xff]
    %v681 = vld [vmem:[#allocation9 + $0x58] sm:$0xff]
    %v682 = vld [vmem:[#allocation9 + $0x60] sm:$0xf]
    %v683 = vld [vmem:[#allocation9 + $0x64] sm:$0xff]
    %v684 = vld [vmem:[#allocation9 + $0x6c] sm:$0xff]
    %v685 = vld [vmem:[#allocation9 + $0x74] sm:$0xf]
    %v686 = vld [vmem:[#allocation9 + $0x78] sm:$0xff]
    %v687 = vld [vmem:[#allocation9 + $0x80] sm:$0xff]
    %v688 = vld [vmem:[#allocation9 + $0x88] sm:$0xf]
    %v689 = vld [vmem:[#allocation9 + $0x8c] sm:$0xff]
    %v690 = vld [vmem:[#allocation9 + $0x94] sm:$0xff]
    %v691 = vld [vmem:[#allocation9 + $0x9c] sm:$0xf]
    %v692 = vld [vmem:[#allocation9 + $0xa0] sm:$0xff]
    %v693 = vld [vmem:[#allocation9 + $0xa8] sm:$0xff]
    %v694 = vld [vmem:[#allocation9 + $0xb0] sm:$0xf]
    %v695 = vld [vmem:[#allocation9 + $0xb4] sm:$0xff]
    %v696 = vld [vmem:[#allocation9 + $0xbc] sm:$0xff]
    %v697 = vld [vmem:[#allocation9 + $0xc4] sm:$0xf]
    %v698 = vld [vmem:[#allocation9 + $0xc8] sm:$0xff]
    %v699 = vld [vmem:[#allocation9 + $0xd0] sm:$0xff]
    %v700 = vld [vmem:[#allocation9 + $0xd8] sm:$0xf]
    %v701 = vld [vmem:[#allocation9 + $0xdc] sm:$0xff]
    %v702 = vld [vmem:[#allocation9 + $0xe4] sm:$0xff]
    %v703 = vld [vmem:[#allocation9 + $0xec] sm:$0xf]
    %v704 = vld [vmem:[#allocation9 + $0xf0] sm:$0xff]
    %v705 = vld [vmem:[#allocation9 + $0xf8] sm:$0xff]
    %v706 = vld [vmem:[#allocation9 + $0x100] sm:$0xf]
    %v707 = vld [vmem:[#allocation9 + $0x104] sm:$0xff]
    %v708 = vld [vmem:[#allocation9 + $0x10c] sm:$0xff]
    %v709 = vld [vmem:[#allocation9 + $0x114] sm:$0xf]
    %v710 = vld [vmem:[#allocation9 + $0x118] sm:$0xff]
    %v711 = vld [vmem:[#allocation9 + $0x120] sm:$0xff]
    %v712 = vld [vmem:[#allocation9 + $0x128] sm:$0xf]
    %v713 = vld [vmem:[#allocation9 + $0x12c] sm:$0xff]
    %v714 = vld [vmem:[#allocation9 + $0x134] sm:$0xff]
    %v715 = vld [vmem:[#allocation9 + $0x13c] sm:$0xf]
    %v716 = vld [vmem:[#allocation9 + $0x140] sm:$0xff]
    %v717 = vld [vmem:[#allocation9 + $0x148] sm:$0xff]
    %v718 = vld [vmem:[#allocation9 + $0x150] sm:$0xf]
    %v719 = vld [vmem:[#allocation9 + $0x154] sm:$0xff]
    %v720 = vld [vmem:[#allocation9 + $0x15c] sm:$0xff]
    %v721 = vld [vmem:[#allocation9 + $0x164] sm:$0xf]
    %v722 = vld [vmem:[#allocation9 + $0x168] sm:$0xff]
    %v723 = vld [vmem:[#allocation9 + $0x170] sm:$0xff]
    %v724 = vld [vmem:[#allocation9 + $0x178] sm:$0xf]
    %v725 = vld [vmem:[#allocation9 + $0x17c] sm:$0xff]
    %v726 = vld [vmem:[#allocation9 + $0x184] sm:$0xff]
    %v727 = vld [vmem:[#allocation9 + $0x18c] sm:$0xf]
    %v728 = vld [vmem:[#allocation9 + $0x190] sm:$0xff]
    %v729 = vld [vmem:[#allocation9 + $0x198] sm:$0xff]
    %v730 = vld [vmem:[#allocation9 + $0x1a0] sm:$0xf]
    %v731 = vld [vmem:[#allocation9 + $0x1a4] sm:$0xff]
    %v732 = vld [vmem:[#allocation9 + $0x1ac] sm:$0xff]
    %v733 = vld [vmem:[#allocation9 + $0x1b4] sm:$0xf]
    %v734 = vld [vmem:[#allocation9 + $0x1b8] sm:$0xff]
    %v735 = vld [vmem:[#allocation9 + $0x1c0] sm:$0xff]
    %v736 = vld [vmem:[#allocation9 + $0x1c8] sm:$0xf]
    %v737 = vld [vmem:[#allocation9 + $0x1cc] sm:$0xff]
    %v738 = vld [vmem:[#allocation9 + $0x1d4] sm:$0xff]
    %v739 = vld [vmem:[#allocation9 + $0x1dc] sm:$0xf]
    %v740 = vld [vmem:[#allocation9 + $0x1e0] sm:$0xff]
    %v741 = vld [vmem:[#allocation9 + $0x1e8] sm:$0xff]
    %v742 = vld [vmem:[#allocation9 + $0x1f0] sm:$0xf]
    %v743 = vld [vmem:[#allocation9 + $0x1f4] sm:$0xff]
    %v744 = vld [vmem:[#allocation9 + $0x1fc] sm:$0xff]
    %v745 = vld [vmem:[#allocation9 + $0x204] sm:$0xf]
    %v746 = vld [vmem:[#allocation9 + $0x208] sm:$0xff]
    %v747 = vld [vmem:[#allocation9 + $0x210] sm:$0xff]
    %v748 = vld [vmem:[#allocation9 + $0x218] sm:$0xf]
    %v749 = vld [vmem:[#allocation9 + $0x21c] sm:$0xff]
    %v750 = vld [vmem:[#allocation9 + $0x224] sm:$0xff]
    %v751 = vld [vmem:[#allocation9 + $0x22c] sm:$0xf]
    %v752 = vld [vmem:[#allocation9 + $0x230] sm:$0xff]
    %v753 = vld [vmem:[#allocation9 + $0x238] sm:$0xff]
    %v754 = vld [vmem:[#allocation9 + $0x240] sm:$0xf]
    %v755 = vld [vmem:[#allocation9 + $0x244] sm:$0xff]
    %v756 = vld [vmem:[#allocation9 + $0x24c] sm:$0xff]
    %v757 = vld [vmem:[#allocation9 + $0x254] sm:$0xf]
    %v758 = vld [vmem:[#allocation9 + $0x258] sm:$0xff]
    %v759 = vld [vmem:[#allocation9 + $0x260] sm:$0xff]
    %v760 = vld [vmem:[#allocation9 + $0x268] sm:$0xf]
    %v761 = vld [vmem:[#allocation9 + $0x26c] sm:$0xff]
    %v762 = vld [vmem:[#allocation9 + $0x274] sm:$0xff]
    %v763 = vld [vmem:[#allocation9 + $0x27c] sm:$0xf]
    %v764 = vld [vmem:[#allocation9 + $0x280] sm:$0xff]
    %v765 = vld [vmem:[#allocation9 + $0x288] sm:$0xff]
    %v766 = vld [vmem:[#allocation9 + $0x290] sm:$0xf]
    %v767 = vld [vmem:[#allocation9 + $0x294] sm:$0xff]
    %v768 = vld [vmem:[#allocation9 + $0x29c] sm:$0xff]
    %v769 = vld [vmem:[#allocation9 + $0x2a4] sm:$0xf]
    %v770 = vld [vmem:[#allocation9 + $0x2a8] sm:$0xff]
    %v771 = vld [vmem:[#allocation9 + $0x2b0] sm:$0xff]
    %v772 = vld [vmem:[#allocation9 + $0x2b8] sm:$0xf]
    %v773 = vld [vmem:[#allocation9 + $0x2bc] sm:$0xff]
    %v774 = vld [vmem:[#allocation9 + $0x2c4] sm:$0xff]
    %v775 = vld [vmem:[#allocation9 + $0x2cc] sm:$0xf]
    %v776 = vld [vmem:[#allocation9 + $0x2d0] sm:$0xff]
    %v777 = vld [vmem:[#allocation9 + $0x2d8] sm:$0xff]
    %v778 = vld [vmem:[#allocation9 + $0x2e0] sm:$0xf]
    %v779 = vld [vmem:[#allocation9 + $0x2e4] sm:$0xff]
    %v780 = vld [vmem:[#allocation9 + $0x2ec] sm:$0xff]
    %v781 = vld [vmem:[#allocation9 + $0x2f4] sm:$0xf]
    %v782 = vld [vmem:[#allocation9 + $0x2f8] sm:$0xff]
    %v783 = vld [vmem:[#allocation9 + $0x300] sm:$0xff]
    %v784 = vld [vmem:[#allocation9 + $0x308] sm:$0xf]
    %v785 = vld [vmem:[#allocation9 + $0x30c] sm:$0xff]
    %v786 = vld [vmem:[#allocation9 + $0x314] sm:$0xff]
    %v787 = vld [vmem:[#allocation9 + $0x31c] sm:$0xf]
    %v788 = vld [vmem:[#allocation9 + $0x320] sm:$0xff]
    %v789 = vld [vmem:[#allocation9 + $0x328] sm:$0xff]
    %v790 = vld [vmem:[#allocation9 + $0x330] sm:$0xf]
    %v791 = vld [vmem:[#allocation9 + $0x334] sm:$0xff]
    %v792 = vld [vmem:[#allocation9 + $0x33c] sm:$0xff]
    %v793 = vld [vmem:[#allocation9 + $0x344] sm:$0xf]
    %v794 = vld [vmem:[#allocation9 + $0x348] sm:$0xff]
    %v795 = vld [vmem:[#allocation9 + $0x350] sm:$0xff]
    %v796 = vld [vmem:[#allocation9 + $0x358] sm:$0xf]
    %v797 = vld [vmem:[#allocation9 + $0x35c] sm:$0xff]
    %v798 = vld [vmem:[#allocation9 + $0x364] sm:$0xff]
    %v799 = vld [vmem:[#allocation9 + $0x36c] sm:$0xf]
    %v800 = vld [vmem:[#allocation9 + $0x370] sm:$0xff]
    %v801 = vld [vmem:[#allocation9 + $0x378] sm:$0xff]
    %v802 = vld [vmem:[#allocation9 + $0x380] sm:$0xf]
    %v803 = vld [vmem:[#allocation9 + $0x384] sm:$0xff]
    %v804 = vld [vmem:[#allocation9 + $0x38c] sm:$0xff]
    %v805 = vld [vmem:[#allocation9 + $0x394] sm:$0xf]
    %v806 = vld [vmem:[#allocation9 + $0x398] sm:$0xff]
    %v807 = vld [vmem:[#allocation9 + $0x3a0] sm:$0xff]
    %v808 = vld [vmem:[#allocation9 + $0x3a8] sm:$0xf]
    %v809 = vld [vmem:[#allocation9 + $0x3ac] sm:$0xff]
    %v810 = vld [vmem:[#allocation9 + $0x3b4] sm:$0xff]
    %v811 = vld [vmem:[#allocation9 + $0x3bc] sm:$0xf]
    %v812 = vld [vmem:[#allocation9 + $0x3c0] sm:$0xff]
    %v813 = vld [vmem:[#allocation9 + $0x3c8] sm:$0xff]
    %v814 = vld [vmem:[#allocation9 + $0x3d0] sm:$0xf]
    %v815 = vld [vmem:[#allocation9 + $0x3d4] sm:$0xff]
    %v816 = vld [vmem:[#allocation9 + $0x3dc] sm:$0xff]
    %v817 = vld [vmem:[#allocation9 + $0x3e4] sm:$0xf]
    %v818 = vld [vmem:[#allocation9 + $0x3e8] sm:$0xff]
    %v819 = vld [vmem:[#allocation9 + $0x3f0] sm:$0xff]
    %v820 = vld [vmem:[#allocation9 + $0x3f8] sm:$0xf]
    %v821 = vld [vmem:[#allocation9 + $0x3fc] sm:$0xff]
    %v822 = vld [vmem:[#allocation9 + $0x404] sm:$0xff]
    %v823 = vld [vmem:[#allocation9 + $0x40c] sm:$0xf]
    %v824 = vld [vmem:[#allocation9 + $0x410] sm:$0xff]
    %v825 = vld [vmem:[#allocation9 + $0x418] sm:$0xff]
    %v826 = vld [vmem:[#allocation9 + $0x420] sm:$0xf]
    %v827 = vld [vmem:[#allocation9 + $0x424] sm:$0xff]
    %v828 = vld [vmem:[#allocation9 + $0x42c] sm:$0xff]
    %v829 = vld [vmem:[#allocation9 + $0x434] sm:$0xf]
    %v830 = vld [vmem:[#allocation9 + $0x438] sm:$0xff]
    %v831 = vld [vmem:[#allocation9 + $0x440] sm:$0xff]
    %v832 = vld [vmem:[#allocation9 + $0x448] sm:$0xf]
    %v833 = vld [vmem:[#allocation9 + $0x44c] sm:$0xff]
    %v834 = vld [vmem:[#allocation9 + $0x454] sm:$0xff]
    %v835 = vld [vmem:[#allocation9 + $0x45c] sm:$0xf]
    %v836 = vld [vmem:[#allocation9 + $0x460] sm:$0xff]
    %v837 = vld [vmem:[#allocation9 + $0x468] sm:$0xff]
    %v838 = vld [vmem:[#allocation9 + $0x470] sm:$0xf]
    %v839 = vld [vmem:[#allocation9 + $0x474] sm:$0xff]
    %v840 = vld [vmem:[#allocation9 + $0x47c] sm:$0xff]
    %v841 = vld [vmem:[#allocation9 + $0x484] sm:$0xf]
    %v842 = vld [vmem:[#allocation9 + $0x488] sm:$0xff]
    %v843 = vld [vmem:[#allocation9 + $0x490] sm:$0xff]
    %v844 = vld [vmem:[#allocation9 + $0x498] sm:$0xf]
    %v845 = vld [vmem:[#allocation9 + $0x49c] sm:$0xff]
    %v846 = vld [vmem:[#allocation9 + $0x4a4] sm:$0xff]
    %v847 = vld [vmem:[#allocation9 + $0x4ac] sm:$0xf]
    %v848 = vld [vmem:[#allocation9 + $0x4b0] sm:$0xff]
    %v849 = vld [vmem:[#allocation9 + $0x4b8] sm:$0xff]
    %v850 = vld [vmem:[#allocation9 + $0x4c0] sm:$0xf]
    %v851 = vld [vmem:[#allocation9 + $0x4c4] sm:$0xff]
    %v852 = vld [vmem:[#allocation9 + $0x4cc] sm:$0xff]
    %v853 = vld [vmem:[#allocation9 + $0x4d4] sm:$0xf]
    %v854 = vld [vmem:[#allocation9 + $0x4d8] sm:$0xff]
    %v855 = vld [vmem:[#allocation9 + $0x4e0] sm:$0xff]
    %v856 = vld [vmem:[#allocation9 + $0x4e8] sm:$0xf]
    %v857 = vld [vmem:[#allocation9 + $0x4ec] sm:$0xff]
    %v858 = vld [vmem:[#allocation9 + $0x4f4] sm:$0xff]
    %v859 = vld [vmem:[#allocation9 + $0x4fc] sm:$0xf]
    %v860 = vld [vmem:[#allocation9 + $0x500] sm:$0xff]
    %v861 = vld [vmem:[#allocation9 + $0x508] sm:$0xff]
    %v862 = vld [vmem:[#allocation9 + $0x510] sm:$0xf]
    %v863 = vld [vmem:[#allocation9 + $0x514] sm:$0xff]
    %v864 = vld [vmem:[#allocation9 + $0x51c] sm:$0xff]
    %v865 = vld [vmem:[#allocation9 + $0x524] sm:$0xf]
    %v866 = vld [vmem:[#allocation9 + $0x528] sm:$0xff]
    %v867 = vld [vmem:[#allocation9 + $0x530] sm:$0xff]
    %v868 = vld [vmem:[#allocation9 + $0x538] sm:$0xf]
    %v869 = vld [vmem:[#allocation9 + $0x53c] sm:$0xff]
    %v870 = vld [vmem:[#allocation9 + $0x544] sm:$0xff]
    %v871 = vld [vmem:[#allocation9 + $0x54c] sm:$0xf]
    %v872 = vld [vmem:[#allocation9 + $0x550] sm:$0xff]
    %v873 = vld [vmem:[#allocation9 + $0x558] sm:$0xff]
    %v874 = vld [vmem:[#allocation9 + $0x560] sm:$0xf]
    %v875 = vld [vmem:[#allocation9 + $0x564] sm:$0xff]
    %v876 = vld [vmem:[#allocation9 + $0x56c] sm:$0xff]
    %v877 = vld [vmem:[#allocation9 + $0x574] sm:$0xf]
    %v878 = vld [vmem:[#allocation9 + $0x578] sm:$0xff]
    %v879 = vld [vmem:[#allocation9 + $0x580] sm:$0xff]
    %v880 = vld [vmem:[#allocation9 + $0x588] sm:$0xf]
    %v881 = vld [vmem:[#allocation9 + $0x58c] sm:$0xff]
    %v882 = vld [vmem:[#allocation9 + $0x594] sm:$0xff]
    %v883 = vld [vmem:[#allocation9 + $0x59c] sm:$0xf]
    %v884 = vld [vmem:[#allocation9 + $0x5a0] sm:$0xff]
    %v885 = vld [vmem:[#allocation9 + $0x5a8] sm:$0xff]
    %v886 = vld [vmem:[#allocation9 + $0x5b0] sm:$0xf]
    %v887 = vld [vmem:[#allocation9 + $0x5b4] sm:$0xff]
    %v888 = vld [vmem:[#allocation9 + $0x5bc] sm:$0xff]
    %v889 = vld [vmem:[#allocation9 + $0x5c4] sm:$0xf]
    %v890 = vld [vmem:[#allocation9 + $0x5c8] sm:$0xff]
    %v891 = vld [vmem:[#allocation9 + $0x5d0] sm:$0xff]
    %v892 = vld [vmem:[#allocation9 + $0x5d8] sm:$0xf]
    %v893 = vld [vmem:[#allocation9 + $0x5dc] sm:$0xff]
    %v894 = vld [vmem:[#allocation9 + $0x5e4] sm:$0xff]
    %v895 = vld [vmem:[#allocation9 + $0x5ec] sm:$0xf]
    %v896 = vld [vmem:[#allocation9 + $0x5f0] sm:$0xff]
    %v897 = vld [vmem:[#allocation9 + $0x5f8] sm:$0xff]
    %v898 = vld [vmem:[#allocation9 + $0x600] sm:$0xf]
    %v899 = vld [vmem:[#allocation9 + $0x604] sm:$0xff]
    %v900 = vld [vmem:[#allocation9 + $0x60c] sm:$0xff]
    %v901 = vld [vmem:[#allocation9 + $0x614] sm:$0xf]
    %v902 = vld [vmem:[#allocation9 + $0x618] sm:$0xff]
    %v903 = vld [vmem:[#allocation9 + $0x620] sm:$0xff]
    %v904 = vld [vmem:[#allocation9 + $0x628] sm:$0xf]
    %v905 = vld [vmem:[#allocation9 + $0x62c] sm:$0xff]
    %v906 = vld [vmem:[#allocation9 + $0x634] sm:$0xff]
    %v907 = vld [vmem:[#allocation9 + $0x63c] sm:$0xf]
    %v908 = vpack.c.bf16 %v607, %v607
    %v909 = vpack.c.bf16 %v622, %v622
    %v910 = vpack.c.bf16 %v637, %v637
    %v911 = vpack.c.bf16 %v652, %v652
    %v912 = vpack.c.bf16 %v667, %v667
    %v914 = vperm.slane %v421, 0
    %v915 = vperm.slane %v421, 1
    %v916 = vperm.slane %v421, 2
    %v917 = vperm.slane %v421, 3
    %v918 = vperm.slane %v421, 4
    %v1164 = vunpack.c.l.b16 %v668
    %v1165 = vunpack.c.h.b16 %v668
    %v1166 = vunpack.c.l.b16 %v669
    %v1167 = vunpack.c.h.b16 %v669
    %v1168 = vunpack.c.l.b16 %v670
    %v1169 = vunpack.c.l.b16 %v671
    %v1170 = vunpack.c.h.b16 %v671
    %v1171 = vunpack.c.l.b16 %v672
    %v1172 = vunpack.c.h.b16 %v672
    %v1173 = vunpack.c.l.b16 %v673
    %v1174 = vunpack.c.l.b16 %v674
    %v1175 = vunpack.c.h.b16 %v674
    %v1176 = vunpack.c.l.b16 %v675
    %v1177 = vunpack.c.h.b16 %v675
    %v1178 = vunpack.c.l.b16 %v676
    %v1179 = vunpack.c.l.b16 %v677
    %v1180 = vunpack.c.h.b16 %v677
    %v1181 = vunpack.c.l.b16 %v678
    %v1182 = vunpack.c.h.b16 %v678
    %v1183 = vunpack.c.l.b16 %v679
    %v1184 = vunpack.c.l.b16 %v680
    %v1185 = vunpack.c.h.b16 %v680
    %v1186 = vunpack.c.l.b16 %v681
    %v1187 = vunpack.c.h.b16 %v681
    %v1188 = vunpack.c.l.b16 %v682
    %v1189 = vunpack.c.l.b16 %v683
    %v1190 = vunpack.c.h.b16 %v683
    %v1191 = vunpack.c.l.b16 %v684
    %v1192 = vunpack.c.h.b16 %v684
    %v1193 = vunpack.c.l.b16 %v685
    %v1194 = vunpack.c.l.b16 %v686
    %v1195 = vunpack.c.h.b16 %v686
    %v1196 = vunpack.c.l.b16 %v687
    %v1197 = vunpack.c.h.b16 %v687
    %v1198 = vunpack.c.l.b16 %v688
    %v1199 = vunpack.c.l.b16 %v689
    %v1200 = vunpack.c.h.b16 %v689
    %v1201 = vunpack.c.l.b16 %v690
    %v1202 = vunpack.c.h.b16 %v690
    %v1203 = vunpack.c.l.b16 %v691
    %v1204 = vunpack.c.l.b16 %v692
    %v1205 = vunpack.c.h.b16 %v692
    %v1206 = vunpack.c.l.b16 %v693
    %v1207 = vunpack.c.h.b16 %v693
    %v1208 = vunpack.c.l.b16 %v694
    %v1209 = vunpack.c.l.b16 %v695
    %v1210 = vunpack.c.h.b16 %v695
    %v1211 = vunpack.c.l.b16 %v696
    %v1212 = vunpack.c.h.b16 %v696
    %v1213 = vunpack.c.l.b16 %v697
    %v1214 = vunpack.c.l.b16 %v698
    %v1215 = vunpack.c.h.b16 %v698
    %v1216 = vunpack.c.l.b16 %v699
    %v1217 = vunpack.c.h.b16 %v699
    %v1218 = vunpack.c.l.b16 %v700
    %v1219 = vunpack.c.l.b16 %v701
    %v1220 = vunpack.c.h.b16 %v701
    %v1221 = vunpack.c.l.b16 %v702
    %v1222 = vunpack.c.h.b16 %v702
    %v1223 = vunpack.c.l.b16 %v703
    %v1224 = vunpack.c.l.b16 %v704
    %v1225 = vunpack.c.h.b16 %v704
    %v1226 = vunpack.c.l.b16 %v705
    %v1227 = vunpack.c.h.b16 %v705
    %v1228 = vunpack.c.l.b16 %v706
    %v1229 = vunpack.c.l.b16 %v707
    %v1230 = vunpack.c.h.b16 %v707
    %v1231 = vunpack.c.l.b16 %v708
    %v1232 = vunpack.c.h.b16 %v708
    %v1233 = vunpack.c.l.b16 %v709
    %v1234 = vunpack.c.l.b16 %v710
    %v1235 = vunpack.c.h.b16 %v710
    %v1236 = vunpack.c.l.b16 %v711
    %v1237 = vunpack.c.h.b16 %v711
    %v1238 = vunpack.c.l.b16 %v712
    %v1239 = vunpack.c.l.b16 %v713
    %v1240 = vunpack.c.h.b16 %v713
    %v1241 = vunpack.c.l.b16 %v714
    %v1242 = vunpack.c.h.b16 %v714
    %v1243 = vunpack.c.l.b16 %v715
    %v1244 = vunpack.c.l.b16 %v716
    %v1245 = vunpack.c.h.b16 %v716
    %v1246 = vunpack.c.l.b16 %v717
    %v1247 = vunpack.c.h.b16 %v717
    %v1248 = vunpack.c.l.b16 %v718
    %v1249 = vunpack.c.l.b16 %v719
    %v1250 = vunpack.c.h.b16 %v719
    %v1251 = vunpack.c.l.b16 %v720
    %v1252 = vunpack.c.h.b16 %v720
    %v1253 = vunpack.c.l.b16 %v721
    %v1254 = vunpack.c.l.b16 %v722
    %v1255 = vunpack.c.h.b16 %v722
    %v1256 = vunpack.c.l.b16 %v723
    %v1257 = vunpack.c.h.b16 %v723
    %v1258 = vunpack.c.l.b16 %v724
    %v1259 = vunpack.c.l.b16 %v725
    %v1260 = vunpack.c.h.b16 %v725
    %v1261 = vunpack.c.l.b16 %v726
    %v1262 = vunpack.c.h.b16 %v726
    %v1263 = vunpack.c.l.b16 %v727
    %v1264 = vunpack.c.l.b16 %v728
    %v1265 = vunpack.c.h.b16 %v728
    %v1266 = vunpack.c.l.b16 %v729
    %v1267 = vunpack.c.h.b16 %v729
    %v1268 = vunpack.c.l.b16 %v730
    %v1269 = vunpack.c.l.b16 %v731
    %v1270 = vunpack.c.h.b16 %v731
    %v1271 = vunpack.c.l.b16 %v732
    %v1272 = vunpack.c.h.b16 %v732
    %v1273 = vunpack.c.l.b16 %v733
    %v1274 = vunpack.c.l.b16 %v734
    %v1275 = vunpack.c.h.b16 %v734
    %v1276 = vunpack.c.l.b16 %v735
    %v1277 = vunpack.c.h.b16 %v735
    %v1278 = vunpack.c.l.b16 %v736
    %v1279 = vunpack.c.l.b16 %v737
    %v1280 = vunpack.c.h.b16 %v737
    %v1281 = vunpack.c.l.b16 %v738
    %v1282 = vunpack.c.h.b16 %v738
    %v1283 = vunpack.c.l.b16 %v739
    %v1284 = vunpack.c.l.b16 %v740
    %v1285 = vunpack.c.h.b16 %v740
    %v1286 = vunpack.c.l.b16 %v741
    %v1287 = vunpack.c.h.b16 %v741
    %v1288 = vunpack.c.l.b16 %v742
    %v1289 = vunpack.c.l.b16 %v743
    %v1290 = vunpack.c.h.b16 %v743
    %v1291 = vunpack.c.l.b16 %v744
    %v1292 = vunpack.c.h.b16 %v744
    %v1293 = vunpack.c.l.b16 %v745
    %v1294 = vunpack.c.l.b16 %v746
    %v1295 = vunpack.c.h.b16 %v746
    %v1296 = vunpack.c.l.b16 %v747
    %v1297 = vunpack.c.h.b16 %v747
    %v1298 = vunpack.c.l.b16 %v748
    %v1299 = vunpack.c.l.b16 %v749
    %v1300 = vunpack.c.h.b16 %v749
    %v1301 = vunpack.c.l.b16 %v750
    %v1302 = vunpack.c.h.b16 %v750
    %v1303 = vunpack.c.l.b16 %v751
    %v1304 = vunpack.c.l.b16 %v752
    %v1305 = vunpack.c.h.b16 %v752
    %v1306 = vunpack.c.l.b16 %v753
    %v1307 = vunpack.c.h.b16 %v753
    %v1308 = vunpack.c.l.b16 %v754
    %v1309 = vunpack.c.l.b16 %v755
    %v1310 = vunpack.c.h.b16 %v755
    %v1311 = vunpack.c.l.b16 %v756
    %v1312 = vunpack.c.h.b16 %v756
    %v1313 = vunpack.c.l.b16 %v757
    %v1314 = vunpack.c.l.b16 %v758
    %v1315 = vunpack.c.h.b16 %v758
    %v1316 = vunpack.c.l.b16 %v759
    %v1317 = vunpack.c.h.b16 %v759
    %v1318 = vunpack.c.l.b16 %v760
    %v1319 = vunpack.c.l.b16 %v761
    %v1320 = vunpack.c.h.b16 %v761
    %v1321 = vunpack.c.l.b16 %v762
    %v1322 = vunpack.c.h.b16 %v762
    %v1323 = vunpack.c.l.b16 %v763
    %v1324 = vunpack.c.l.b16 %v764
    %v1325 = vunpack.c.h.b16 %v764
    %v1326 = vunpack.c.l.b16 %v765
    %v1327 = vunpack.c.h.b16 %v765
    %v1328 = vunpack.c.l.b16 %v766
    %v1329 = vunpack.c.l.b16 %v767
    %v1330 = vunpack.c.h.b16 %v767
    %v1331 = vunpack.c.l.b16 %v768
    %v1332 = vunpack.c.h.b16 %v768
    %v1333 = vunpack.c.l.b16 %v769
    %v1334 = vunpack.c.l.b16 %v770
    %v1335 = vunpack.c.h.b16 %v770
    %v1336 = vunpack.c.l.b16 %v771
    %v1337 = vunpack.c.h.b16 %v771
    %v1338 = vunpack.c.l.b16 %v772
    %v1339 = vunpack.c.l.b16 %v773
    %v1340 = vunpack.c.h.b16 %v773
    %v1341 = vunpack.c.l.b16 %v774
    %v1342 = vunpack.c.h.b16 %v774
    %v1343 = vunpack.c.l.b16 %v775
    %v1344 = vunpack.c.l.b16 %v776
    %v1345 = vunpack.c.h.b16 %v776
    %v1346 = vunpack.c.l.b16 %v777
    %v1347 = vunpack.c.h.b16 %v777
    %v1348 = vunpack.c.l.b16 %v778
    %v1349 = vunpack.c.l.b16 %v779
    %v1350 = vunpack.c.h.b16 %v779
    %v1351 = vunpack.c.l.b16 %v780
    %v1352 = vunpack.c.h.b16 %v780
    %v1353 = vunpack.c.l.b16 %v781
    %v1354 = vunpack.c.l.b16 %v782
    %v1355 = vunpack.c.h.b16 %v782
    %v1356 = vunpack.c.l.b16 %v783
    %v1357 = vunpack.c.h.b16 %v783
    %v1358 = vunpack.c.l.b16 %v784
    %v1359 = vunpack.c.l.b16 %v785
    %v1360 = vunpack.c.h.b16 %v785
    %v1361 = vunpack.c.l.b16 %v786
    %v1362 = vunpack.c.h.b16 %v786
    %v1363 = vunpack.c.l.b16 %v787
    %v1364 = vunpack.c.l.b16 %v788
    %v1365 = vunpack.c.h.b16 %v788
    %v1366 = vunpack.c.l.b16 %v789
    %v1367 = vunpack.c.h.b16 %v789
    %v1368 = vunpack.c.l.b16 %v790
    %v1369 = vunpack.c.l.b16 %v791
    %v1370 = vunpack.c.h.b16 %v791
    %v1371 = vunpack.c.l.b16 %v792
    %v1372 = vunpack.c.h.b16 %v792
    %v1373 = vunpack.c.l.b16 %v793
    %v1374 = vunpack.c.l.b16 %v794
    %v1375 = vunpack.c.h.b16 %v794
    %v1376 = vunpack.c.l.b16 %v795
    %v1377 = vunpack.c.h.b16 %v795
    %v1378 = vunpack.c.l.b16 %v796
    %v1379 = vunpack.c.l.b16 %v797
    %v1380 = vunpack.c.h.b16 %v797
    %v1381 = vunpack.c.l.b16 %v798
    %v1382 = vunpack.c.h.b16 %v798
    %v1383 = vunpack.c.l.b16 %v799
    %v1384 = vunpack.c.l.b16 %v800
    %v1385 = vunpack.c.h.b16 %v800
    %v1386 = vunpack.c.l.b16 %v801
    %v1387 = vunpack.c.h.b16 %v801
    %v1388 = vunpack.c.l.b16 %v802
    %v1389 = vunpack.c.l.b16 %v803
    %v1390 = vunpack.c.h.b16 %v803
    %v1391 = vunpack.c.l.b16 %v804
    %v1392 = vunpack.c.h.b16 %v804
    %v1393 = vunpack.c.l.b16 %v805
    %v1394 = vunpack.c.l.b16 %v806
    %v1395 = vunpack.c.h.b16 %v806
    %v1396 = vunpack.c.l.b16 %v807
    %v1397 = vunpack.c.h.b16 %v807
    %v1398 = vunpack.c.l.b16 %v808
    %v1399 = vunpack.c.l.b16 %v809
    %v1400 = vunpack.c.h.b16 %v809
    %v1401 = vunpack.c.l.b16 %v810
    %v1402 = vunpack.c.h.b16 %v810
    %v1403 = vunpack.c.l.b16 %v811
    %v1404 = vunpack.c.l.b16 %v812
    %v1405 = vunpack.c.h.b16 %v812
    %v1406 = vunpack.c.l.b16 %v813
    %v1407 = vunpack.c.h.b16 %v813
    %v1408 = vunpack.c.l.b16 %v814
    %v1409 = vunpack.c.l.b16 %v815
    %v1410 = vunpack.c.h.b16 %v815
    %v1411 = vunpack.c.l.b16 %v816
    %v1412 = vunpack.c.h.b16 %v816
    %v1413 = vunpack.c.l.b16 %v817
    %v1414 = vunpack.c.l.b16 %v818
    %v1415 = vunpack.c.h.b16 %v818
    %v1416 = vunpack.c.l.b16 %v819
    %v1417 = vunpack.c.h.b16 %v819
    %v1418 = vunpack.c.l.b16 %v820
    %v1419 = vunpack.c.l.b16 %v821
    %v1420 = vunpack.c.h.b16 %v821
    %v1421 = vunpack.c.l.b16 %v822
    %v1422 = vunpack.c.h.b16 %v822
    %v1423 = vunpack.c.l.b16 %v823
    %v1424 = vunpack.c.l.b16 %v824
    %v1425 = vunpack.c.h.b16 %v824
    %v1426 = vunpack.c.l.b16 %v825
    %v1427 = vunpack.c.h.b16 %v825
    %v1428 = vunpack.c.l.b16 %v826
    %v1429 = vunpack.c.l.b16 %v827
    %v1430 = vunpack.c.h.b16 %v827
    %v1431 = vunpack.c.l.b16 %v828
    %v1432 = vunpack.c.h.b16 %v828
    %v1433 = vunpack.c.l.b16 %v829
    %v1434 = vunpack.c.l.b16 %v830
    %v1435 = vunpack.c.h.b16 %v830
    %v1436 = vunpack.c.l.b16 %v831
    %v1437 = vunpack.c.h.b16 %v831
    %v1438 = vunpack.c.l.b16 %v832
    %v1439 = vunpack.c.l.b16 %v833
    %v1440 = vunpack.c.h.b16 %v833
    %v1441 = vunpack.c.l.b16 %v834
    %v1442 = vunpack.c.h.b16 %v834
    %v1443 = vunpack.c.l.b16 %v835
    %v1444 = vunpack.c.l.b16 %v836
    %v1445 = vunpack.c.h.b16 %v836
    %v1446 = vunpack.c.l.b16 %v837
    %v1447 = vunpack.c.h.b16 %v837
    %v1448 = vunpack.c.l.b16 %v838
    %v1449 = vunpack.c.l.b16 %v839
    %v1450 = vunpack.c.h.b16 %v839
    %v1451 = vunpack.c.l.b16 %v840
    %v1452 = vunpack.c.h.b16 %v840
    %v1453 = vunpack.c.l.b16 %v841
    %v1454 = vunpack.c.l.b16 %v842
    %v1455 = vunpack.c.h.b16 %v842
    %v1456 = vunpack.c.l.b16 %v843
    %v1457 = vunpack.c.h.b16 %v843
    %v1458 = vunpack.c.l.b16 %v844
    %v1459 = vunpack.c.l.b16 %v845
    %v1460 = vunpack.c.h.b16 %v845
    %v1461 = vunpack.c.l.b16 %v846
    %v1462 = vunpack.c.h.b16 %v846
    %v1463 = vunpack.c.l.b16 %v847
    %v1464 = vunpack.c.l.b16 %v848
    %v1465 = vunpack.c.h.b16 %v848
    %v1466 = vunpack.c.l.b16 %v849
    %v1467 = vunpack.c.h.b16 %v849
    %v1468 = vunpack.c.l.b16 %v850
    %v1469 = vunpack.c.l.b16 %v851
    %v1470 = vunpack.c.h.b16 %v851
    %v1471 = vunpack.c.l.b16 %v852
    %v1472 = vunpack.c.h.b16 %v852
    %v1473 = vunpack.c.l.b16 %v853
    %v1474 = vunpack.c.l.b16 %v854
    %v1475 = vunpack.c.h.b16 %v854
    %v1476 = vunpack.c.l.b16 %v855
    %v1477 = vunpack.c.h.b16 %v855
    %v1478 = vunpack.c.l.b16 %v856
    %v1479 = vunpack.c.l.b16 %v857
    %v1480 = vunpack.c.h.b16 %v857
    %v1481 = vunpack.c.l.b16 %v858
    %v1482 = vunpack.c.h.b16 %v858
    %v1483 = vunpack.c.l.b16 %v859
    %v1484 = vunpack.c.l.b16 %v860
    %v1485 = vunpack.c.h.b16 %v860
    %v1486 = vunpack.c.l.b16 %v861
    %v1487 = vunpack.c.h.b16 %v861
    %v1488 = vunpack.c.l.b16 %v862
    %v1489 = vunpack.c.l.b16 %v863
    %v1490 = vunpack.c.h.b16 %v863
    %v1491 = vunpack.c.l.b16 %v864
    %v1492 = vunpack.c.h.b16 %v864
    %v1493 = vunpack.c.l.b16 %v865
    %v1494 = vunpack.c.l.b16 %v866
    %v1495 = vunpack.c.h.b16 %v866
    %v1496 = vunpack.c.l.b16 %v867
    %v1497 = vunpack.c.h.b16 %v867
    %v1498 = vunpack.c.l.b16 %v868
    %v1499 = vunpack.c.l.b16 %v869
    %v1500 = vunpack.c.h.b16 %v869
    %v1501 = vunpack.c.l.b16 %v870
    %v1502 = vunpack.c.h.b16 %v870
    %v1503 = vunpack.c.l.b16 %v871
    %v1504 = vunpack.c.l.b16 %v872
    %v1505 = vunpack.c.h.b16 %v872
    %v1506 = vunpack.c.l.b16 %v873
    %v1507 = vunpack.c.h.b16 %v873
    %v1508 = vunpack.c.l.b16 %v874
    %v1509 = vunpack.c.l.b16 %v875
    %v1510 = vunpack.c.h.b16 %v875
    %v1511 = vunpack.c.l.b16 %v876
    %v1512 = vunpack.c.h.b16 %v876
    %v1513 = vunpack.c.l.b16 %v877
    %v1514 = vunpack.c.l.b16 %v878
    %v1515 = vunpack.c.h.b16 %v878
    %v1516 = vunpack.c.l.b16 %v879
    %v1517 = vunpack.c.h.b16 %v879
    %v1518 = vunpack.c.l.b16 %v880
    %v1519 = vunpack.c.l.b16 %v881
    %v1520 = vunpack.c.h.b16 %v881
    %v1521 = vunpack.c.l.b16 %v882
    %v1522 = vunpack.c.h.b16 %v882
    %v1523 = vunpack.c.l.b16 %v883
    %v1524 = vunpack.c.l.b16 %v884
    %v1525 = vunpack.c.h.b16 %v884
    %v1526 = vunpack.c.l.b16 %v885
    %v1527 = vunpack.c.h.b16 %v885
    %v1528 = vunpack.c.l.b16 %v886
    %v1529 = vunpack.c.l.b16 %v887
    %v1530 = vunpack.c.h.b16 %v887
    %v1531 = vunpack.c.l.b16 %v888
    %v1532 = vunpack.c.h.b16 %v888
    %v1533 = vunpack.c.l.b16 %v889
    %v1534 = vunpack.c.l.b16 %v890
    %v1535 = vunpack.c.h.b16 %v890
    %v1536 = vunpack.c.l.b16 %v891
    %v1537 = vunpack.c.h.b16 %v891
    %v1538 = vunpack.c.l.b16 %v892
    %v1539 = vunpack.c.l.b16 %v893
    %v1540 = vunpack.c.h.b16 %v893
    %v1541 = vunpack.c.l.b16 %v894
    %v1542 = vunpack.c.h.b16 %v894
    %v1543 = vunpack.c.l.b16 %v895
    %v1544 = vunpack.c.l.b16 %v896
    %v1545 = vunpack.c.h.b16 %v896
    %v1546 = vunpack.c.l.b16 %v897
    %v1547 = vunpack.c.h.b16 %v897
    %v1548 = vunpack.c.l.b16 %v898
    %v1549 = vunpack.c.l.b16 %v899
    %v1550 = vunpack.c.h.b16 %v899
    %v1551 = vunpack.c.l.b16 %v900
    %v1552 = vunpack.c.h.b16 %v900
    %v1553 = vunpack.c.l.b16 %v901
    %v1554 = vunpack.c.l.b16 %v902
    %v1555 = vunpack.c.h.b16 %v902
    %v1556 = vunpack.c.l.b16 %v903
    %v1557 = vunpack.c.h.b16 %v903
    %v1558 = vunpack.c.l.b16 %v904
    %v1559 = vunpack.c.l.b16 %v905
    %v1560 = vunpack.c.h.b16 %v905
    %v1561 = vunpack.c.l.b16 %v906
    %v1562 = vunpack.c.h.b16 %v906
    %v1563 = vunpack.c.l.b16 %v907
    %v1564 = vpack.c.b16 %v1169, %v1164
    %v1565 = vpack.c.b16 %v1170, %v1165
    %v1566 = vpack.c.b16 %v1171, %v1166
    %v1567 = vpack.c.b16 %v1172, %v1167
    %v1568 = vpack.c.b16 %v1173, %v1168
    %v1569 = vpack.c.b16 %v1179, %v1174
    %v1570 = vpack.c.b16 %v1180, %v1175
    %v1571 = vpack.c.b16 %v1181, %v1176
    %v1572 = vpack.c.b16 %v1182, %v1177
    %v1573 = vpack.c.b16 %v1183, %v1178
    %v1574 = vpack.c.b16 %v1189, %v1184
    %v1575 = vpack.c.b16 %v1190, %v1185
    %v1576 = vpack.c.b16 %v1191, %v1186
    %v1577 = vpack.c.b16 %v1192, %v1187
    %v1578 = vpack.c.b16 %v1193, %v1188
    %v1579 = vpack.c.b16 %v1199, %v1194
    %v1580 = vpack.c.b16 %v1200, %v1195
    %v1581 = vpack.c.b16 %v1201, %v1196
    %v1582 = vpack.c.b16 %v1202, %v1197
    %v1583 = vpack.c.b16 %v1203, %v1198
    %v1584 = vpack.c.b16 %v1209, %v1204
    %v1585 = vpack.c.b16 %v1210, %v1205
    %v1586 = vpack.c.b16 %v1211, %v1206
    %v1587 = vpack.c.b16 %v1212, %v1207
    %v1588 = vpack.c.b16 %v1213, %v1208
    %v1589 = vpack.c.b16 %v1219, %v1214
    %v1590 = vpack.c.b16 %v1220, %v1215
    %v1591 = vpack.c.b16 %v1221, %v1216
    %v1592 = vpack.c.b16 %v1222, %v1217
    %v1593 = vpack.c.b16 %v1223, %v1218
    %v1594 = vpack.c.b16 %v1229, %v1224
    %v1595 = vpack.c.b16 %v1230, %v1225
    %v1596 = vpack.c.b16 %v1231, %v1226
    %v1597 = vpack.c.b16 %v1232, %v1227
    %v1598 = vpack.c.b16 %v1233, %v1228
    %v1599 = vpack.c.b16 %v1239, %v1234
    %v1600 = vpack.c.b16 %v1240, %v1235
    %v1601 = vpack.c.b16 %v1241, %v1236
    %v1602 = vpack.c.b16 %v1242, %v1237
    %v1603 = vpack.c.b16 %v1243, %v1238
    %v1604 = vpack.c.b16 %v1249, %v1244
    %v1605 = vpack.c.b16 %v1250, %v1245
    %v1606 = vpack.c.b16 %v1251, %v1246
    %v1607 = vpack.c.b16 %v1252, %v1247
    %v1608 = vpack.c.b16 %v1253, %v1248
    %v1609 = vpack.c.b16 %v1259, %v1254
    %v1610 = vpack.c.b16 %v1260, %v1255
    %v1611 = vpack.c.b16 %v1261, %v1256
    %v1612 = vpack.c.b16 %v1262, %v1257
    %v1613 = vpack.c.b16 %v1263, %v1258
    %v1614 = vpack.c.b16 %v1269, %v1264
    %v1615 = vpack.c.b16 %v1270, %v1265
    %v1616 = vpack.c.b16 %v1271, %v1266
    %v1617 = vpack.c.b16 %v1272, %v1267
    %v1618 = vpack.c.b16 %v1273, %v1268
    %v1619 = vpack.c.b16 %v1279, %v1274
    %v1620 = vpack.c.b16 %v1280, %v1275
    %v1621 = vpack.c.b16 %v1281, %v1276
    %v1622 = vpack.c.b16 %v1282, %v1277
    %v1623 = vpack.c.b16 %v1283, %v1278
    %v1624 = vpack.c.b16 %v1289, %v1284
    %v1625 = vpack.c.b16 %v1290, %v1285
    %v1626 = vpack.c.b16 %v1291, %v1286
    %v1627 = vpack.c.b16 %v1292, %v1287
    %v1628 = vpack.c.b16 %v1293, %v1288
    %v1629 = vpack.c.b16 %v1299, %v1294
    %v1630 = vpack.c.b16 %v1300, %v1295
    %v1631 = vpack.c.b16 %v1301, %v1296
    %v1632 = vpack.c.b16 %v1302, %v1297
    %v1633 = vpack.c.b16 %v1303, %v1298
    %v1634 = vpack.c.b16 %v1309, %v1304
    %v1635 = vpack.c.b16 %v1310, %v1305
    %v1636 = vpack.c.b16 %v1311, %v1306
    %v1637 = vpack.c.b16 %v1312, %v1307
    %v1638 = vpack.c.b16 %v1313, %v1308
    %v1639 = vpack.c.b16 %v1319, %v1314
    %v1640 = vpack.c.b16 %v1320, %v1315
    %v1641 = vpack.c.b16 %v1321, %v1316
    %v1642 = vpack.c.b16 %v1322, %v1317
    %v1643 = vpack.c.b16 %v1323, %v1318
    %v1644 = vpack.c.b16 %v1329, %v1324
    %v1645 = vpack.c.b16 %v1330, %v1325
    %v1646 = vpack.c.b16 %v1331, %v1326
    %v1647 = vpack.c.b16 %v1332, %v1327
    %v1648 = vpack.c.b16 %v1333, %v1328
    %v1649 = vpack.c.b16 %v1339, %v1334
    %v1650 = vpack.c.b16 %v1340, %v1335
    %v1651 = vpack.c.b16 %v1341, %v1336
    %v1652 = vpack.c.b16 %v1342, %v1337
    %v1653 = vpack.c.b16 %v1343, %v1338
    %v1654 = vpack.c.b16 %v1349, %v1344
    %v1655 = vpack.c.b16 %v1350, %v1345
    %v1656 = vpack.c.b16 %v1351, %v1346
    %v1657 = vpack.c.b16 %v1352, %v1347
    %v1658 = vpack.c.b16 %v1353, %v1348
    %v1659 = vpack.c.b16 %v1359, %v1354
    %v1660 = vpack.c.b16 %v1360, %v1355
    %v1661 = vpack.c.b16 %v1361, %v1356
    %v1662 = vpack.c.b16 %v1362, %v1357
    %v1663 = vpack.c.b16 %v1363, %v1358
    %v1664 = vpack.c.b16 %v1369, %v1364
    %v1665 = vpack.c.b16 %v1370, %v1365
    %v1666 = vpack.c.b16 %v1371, %v1366
    %v1667 = vpack.c.b16 %v1372, %v1367
    %v1668 = vpack.c.b16 %v1373, %v1368
    %v1669 = vpack.c.b16 %v1379, %v1374
    %v1670 = vpack.c.b16 %v1380, %v1375
    %v1671 = vpack.c.b16 %v1381, %v1376
    %v1672 = vpack.c.b16 %v1382, %v1377
    %v1673 = vpack.c.b16 %v1383, %v1378
    %v1674 = vpack.c.b16 %v1389, %v1384
    %v1675 = vpack.c.b16 %v1390, %v1385
    %v1676 = vpack.c.b16 %v1391, %v1386
    %v1677 = vpack.c.b16 %v1392, %v1387
    %v1678 = vpack.c.b16 %v1393, %v1388
    %v1679 = vpack.c.b16 %v1399, %v1394
    %v1680 = vpack.c.b16 %v1400, %v1395
    %v1681 = vpack.c.b16 %v1401, %v1396
    %v1682 = vpack.c.b16 %v1402, %v1397
    %v1683 = vpack.c.b16 %v1403, %v1398
    %v1684 = vpack.c.b16 %v1409, %v1404
    %v1685 = vpack.c.b16 %v1410, %v1405
    %v1686 = vpack.c.b16 %v1411, %v1406
    %v1687 = vpack.c.b16 %v1412, %v1407
    %v1688 = vpack.c.b16 %v1413, %v1408
    %v1689 = vpack.c.b16 %v1419, %v1414
    %v1690 = vpack.c.b16 %v1420, %v1415
    %v1691 = vpack.c.b16 %v1421, %v1416
    %v1692 = vpack.c.b16 %v1422, %v1417
    %v1693 = vpack.c.b16 %v1423, %v1418
    %v1694 = vpack.c.b16 %v1429, %v1424
    %v1695 = vpack.c.b16 %v1430, %v1425
    %v1696 = vpack.c.b16 %v1431, %v1426
    %v1697 = vpack.c.b16 %v1432, %v1427
    %v1698 = vpack.c.b16 %v1433, %v1428
    %v1699 = vpack.c.b16 %v1439, %v1434
    %v1700 = vpack.c.b16 %v1440, %v1435
    %v1701 = vpack.c.b16 %v1441, %v1436
    %v1702 = vpack.c.b16 %v1442, %v1437
    %v1703 = vpack.c.b16 %v1443, %v1438
    %v1704 = vpack.c.b16 %v1449, %v1444
    %v1705 = vpack.c.b16 %v1450, %v1445
    %v1706 = vpack.c.b16 %v1451, %v1446
    %v1707 = vpack.c.b16 %v1452, %v1447
    %v1708 = vpack.c.b16 %v1453, %v1448
    %v1709 = vpack.c.b16 %v1459, %v1454
    %v1710 = vpack.c.b16 %v1460, %v1455
    %v1711 = vpack.c.b16 %v1461, %v1456
    %v1712 = vpack.c.b16 %v1462, %v1457
    %v1713 = vpack.c.b16 %v1463, %v1458
    %v1714 = vpack.c.b16 %v1469, %v1464
    %v1715 = vpack.c.b16 %v1470, %v1465
    %v1716 = vpack.c.b16 %v1471, %v1466
    %v1717 = vpack.c.b16 %v1472, %v1467
    %v1718 = vpack.c.b16 %v1473, %v1468
    %v1719 = vpack.c.b16 %v1479, %v1474
    %v1720 = vpack.c.b16 %v1480, %v1475
    %v1721 = vpack.c.b16 %v1481, %v1476
    %v1722 = vpack.c.b16 %v1482, %v1477
    %v1723 = vpack.c.b16 %v1483, %v1478
    %v1724 = vpack.c.b16 %v1489, %v1484
    %v1725 = vpack.c.b16 %v1490, %v1485
    %v1726 = vpack.c.b16 %v1491, %v1486
    %v1727 = vpack.c.b16 %v1492, %v1487
    %v1728 = vpack.c.b16 %v1493, %v1488
    %v1729 = vpack.c.b16 %v1499, %v1494
    %v1730 = vpack.c.b16 %v1500, %v1495
    %v1731 = vpack.c.b16 %v1501, %v1496
    %v1732 = vpack.c.b16 %v1502, %v1497
    %v1733 = vpack.c.b16 %v1503, %v1498
    %v1734 = vpack.c.b16 %v1509, %v1504
    %v1735 = vpack.c.b16 %v1510, %v1505
    %v1736 = vpack.c.b16 %v1511, %v1506
    %v1737 = vpack.c.b16 %v1512, %v1507
    %v1738 = vpack.c.b16 %v1513, %v1508
    %v1739 = vpack.c.b16 %v1519, %v1514
    %v1740 = vpack.c.b16 %v1520, %v1515
    %v1741 = vpack.c.b16 %v1521, %v1516
    %v1742 = vpack.c.b16 %v1522, %v1517
    %v1743 = vpack.c.b16 %v1523, %v1518
    %v1744 = vpack.c.b16 %v1529, %v1524
    %v1745 = vpack.c.b16 %v1530, %v1525
    %v1746 = vpack.c.b16 %v1531, %v1526
    %v1747 = vpack.c.b16 %v1532, %v1527
    %v1748 = vpack.c.b16 %v1533, %v1528
    %v1749 = vpack.c.b16 %v1539, %v1534
    %v1750 = vpack.c.b16 %v1540, %v1535
    %v1751 = vpack.c.b16 %v1541, %v1536
    %v1752 = vpack.c.b16 %v1542, %v1537
    %v1753 = vpack.c.b16 %v1543, %v1538
    %v1754 = vpack.c.b16 %v1549, %v1544
    %v1755 = vpack.c.b16 %v1550, %v1545
    %v1756 = vpack.c.b16 %v1551, %v1546
    %v1757 = vpack.c.b16 %v1552, %v1547
    %v1758 = vpack.c.b16 %v1553, %v1548
    %v1759 = vpack.c.b16 %v1559, %v1554
    %v1760 = vpack.c.b16 %v1560, %v1555
    %v1761 = vpack.c.b16 %v1561, %v1556
    %v1762 = vpack.c.b16 %v1562, %v1557
    %v1763 = vpack.c.b16 %v1563, %v1558
    %1964 = vmatpush.bf16.msra.mxu0 %v1599
    %1965 = vmatpush.bf16.msra.mxu0 %v1594
    %1966 = vmatpush.bf16.msra.mxu0 %v1589
    %1967 = vmatpush.bf16.msra.mxu0 %v1584
    %1968 = vmatpush.bf16.msra.mxu0 %v1579
    %1969 = vmatpush.bf16.msra.mxu0 %v1574
    %1970 = vmatpush.bf16.msra.mxu0 %v1569
    %1971 = vmatpush.bf16.msra.mxu0 %v1564
    %1972 = vmatmul.bf16.gmra.mxu0 %v908
    %v1973 = vpop.f32.mrf.mxu0
    %v1974 = vadd.f32 %v914, %v1973
    %v1975 = vpop.f32.mrf.mxu0
    %1976 = vdwg.mxu0
    %1977 = vmatpush.bf16.msra.mxu0 %v1639
    %1978 = vmatpush.bf16.msra.mxu0 %v1634
    %1979 = vmatpush.bf16.msra.mxu0 %v1629
    %1980 = vmatpush.bf16.msra.mxu0 %v1624
    %1981 = vmatpush.bf16.msra.mxu0 %v1619
    %1982 = vmatpush.bf16.msra.mxu0 %v1614
    %1983 = vmatpush.bf16.msra.mxu0 %v1609
    %1984 = vmatpush.bf16.msra.mxu0 %v1604
    %1985 = vmatmul.bf16.gmra.mxu0 %v909
    %v1986 = vpop.f32.mrf.mxu0
    %v1987 = vadd.f32 %v1974, %v1986
    %v1988 = vpop.f32.mrf.mxu0
    %1989 = vdwg.mxu0
    %1990 = vmatpush.bf16.msra.mxu0 %v1679
    %1991 = vmatpush.bf16.msra.mxu0 %v1674
    %1992 = vmatpush.bf16.msra.mxu0 %v1669
    %1993 = vmatpush.bf16.msra.mxu0 %v1664
    %1994 = vmatpush.bf16.msra.mxu0 %v1659
    %1995 = vmatpush.bf16.msra.mxu0 %v1654
    %1996 = vmatpush.bf16.msra.mxu0 %v1649
    %1997 = vmatpush.bf16.msra.mxu0 %v1644
    %1998 = vmatmul.bf16.gmra.mxu0 %v910
    %v1999 = vpop.f32.mrf.mxu0
    %v2000 = vadd.f32 %v1987, %v1999
    %v2001 = vpop.f32.mrf.mxu0
    %2002 = vdwg.mxu0
    %2003 = vmatpush.bf16.msra.mxu0 %v1719
    %2004 = vmatpush.bf16.msra.mxu0 %v1714
    %2005 = vmatpush.bf16.msra.mxu0 %v1709
    %2006 = vmatpush.bf16.msra.mxu0 %v1704
    %2007 = vmatpush.bf16.msra.mxu0 %v1699
    %2008 = vmatpush.bf16.msra.mxu0 %v1694
    %2009 = vmatpush.bf16.msra.mxu0 %v1689
    %2010 = vmatpush.bf16.msra.mxu0 %v1684
    %2011 = vmatmul.bf16.gmra.mxu0 %v911
    %v2012 = vpop.f32.mrf.mxu0
    %v2013 = vadd.f32 %v2000, %v2012
    %v2014 = vpop.f32.mrf.mxu0
    %2015 = vdwg.mxu0
    %2016 = vmatpush.bf16.msra.mxu0 %v1759
    %2017 = vmatpush.bf16.msra.mxu0 %v1754
    %2018 = vmatpush.bf16.msra.mxu0 %v1749
    %2019 = vmatpush.bf16.msra.mxu0 %v1744
    %2020 = vmatpush.bf16.msra.mxu0 %v1739
    %2021 = vmatpush.bf16.msra.mxu0 %v1734
    %2022 = vmatpush.bf16.msra.mxu0 %v1729
    %2023 = vmatpush.bf16.msra.mxu0 %v1724
    %2024 = vmatmul.bf16.gmra.mxu0 %v912
    %v2025 = vpop.f32.mrf.mxu0
    %v2026 = vadd.f32 %v2013, %v2025
    %v2027 = vpop.f32.mrf.mxu0
    %2028 = vdwg.mxu0
    %2029 = vmatpush.bf16.msra.mxu0 %v1600
    %2030 = vmatpush.bf16.msra.mxu0 %v1595
    %2031 = vmatpush.bf16.msra.mxu0 %v1590
    %2032 = vmatpush.bf16.msra.mxu0 %v1585
    %2033 = vmatpush.bf16.msra.mxu0 %v1580
    %2034 = vmatpush.bf16.msra.mxu0 %v1575
    %2035 = vmatpush.bf16.msra.mxu0 %v1570
    %2036 = vmatpush.bf16.msra.mxu0 %v1565
    %2037 = vmatmul.bf16.gmra.mxu0 %v908
    %v2038 = vpop.f32.mrf.mxu0
    %v2039 = vadd.f32 %v915, %v2038
    %v2040 = vpop.f32.mrf.mxu0
    %2041 = vdwg.mxu0
    %2042 = vmatpush.bf16.msra.mxu0 %v1640
    %2043 = vmatpush.bf16.msra.mxu0 %v1635
    %2044 = vmatpush.bf16.msra.mxu0 %v1630
    %2045 = vmatpush.bf16.msra.mxu0 %v1625
    %2046 = vmatpush.bf16.msra.mxu0 %v1620
    %2047 = vmatpush.bf16.msra.mxu0 %v1615
    %2048 = vmatpush.bf16.msra.mxu0 %v1610
    %2049 = vmatpush.bf16.msra.mxu0 %v1605
    %2050 = vmatmul.bf16.gmra.mxu0 %v909
    %v2051 = vpop.f32.mrf.mxu0
    %v2052 = vadd.f32 %v2039, %v2051
    %v2053 = vpop.f32.mrf.mxu0
    %2054 = vdwg.mxu0
    %2055 = vmatpush.bf16.msra.mxu0 %v1680
    %2056 = vmatpush.bf16.msra.mxu0 %v1675
    %2057 = vmatpush.bf16.msra.mxu0 %v1670
    %2058 = vmatpush.bf16.msra.mxu0 %v1665
    %2059 = vmatpush.bf16.msra.mxu0 %v1660
    %2060 = vmatpush.bf16.msra.mxu0 %v1655
    %2061 = vmatpush.bf16.msra.mxu0 %v1650
    %2062 = vmatpush.bf16.msra.mxu0 %v1645
    %2063 = vmatmul.bf16.gmra.mxu0 %v910
    %v2064 = vpop.f32.mrf.mxu0
    %v2065 = vadd.f32 %v2052, %v2064
    %v2066 = vpop.f32.mrf.mxu0
    %2067 = vdwg.mxu0
    %2068 = vmatpush.bf16.msra.mxu0 %v1720
    %2069 = vmatpush.bf16.msra.mxu0 %v1715
    %2070 = vmatpush.bf16.msra.mxu0 %v1710
    %2071 = vmatpush.bf16.msra.mxu0 %v1705
    %2072 = vmatpush.bf16.msra.mxu0 %v1700
    %2073 = vmatpush.bf16.msra.mxu0 %v1695
    %2074 = vmatpush.bf16.msra.mxu0 %v1690
    %2075 = vmatpush.bf16.msra.mxu0 %v1685
    %2076 = vmatmul.bf16.gmra.mxu0 %v911
    %v2077 = vpop.f32.mrf.mxu0
    %v2078 = vadd.f32 %v2065, %v2077
    %v2079 = vpop.f32.mrf.mxu0
    %2080 = vdwg.mxu0
    %2081 = vmatpush.bf16.msra.mxu0 %v1760
    %2082 = vmatpush.bf16.msra.mxu0 %v1755
    %2083 = vmatpush.bf16.msra.mxu0 %v1750
    %2084 = vmatpush.bf16.msra.mxu0 %v1745
    %2085 = vmatpush.bf16.msra.mxu0 %v1740
    %2086 = vmatpush.bf16.msra.mxu0 %v1735
    %2087 = vmatpush.bf16.msra.mxu0 %v1730
    %2088 = vmatpush.bf16.msra.mxu0 %v1725
    %2089 = vmatmul.bf16.gmra.mxu0 %v912
    %v2090 = vpop.f32.mrf.mxu0
    %v2091 = vadd.f32 %v2078, %v2090
    %v2092 = vpop.f32.mrf.mxu0
    %2093 = vdwg.mxu0
    %2094 = vmatpush.bf16.msra.mxu0 %v1601
    %2095 = vmatpush.bf16.msra.mxu0 %v1596
    %2096 = vmatpush.bf16.msra.mxu0 %v1591
    %2097 = vmatpush.bf16.msra.mxu0 %v1586
    %2098 = vmatpush.bf16.msra.mxu0 %v1581
    %2099 = vmatpush.bf16.msra.mxu0 %v1576
    %2100 = vmatpush.bf16.msra.mxu0 %v1571
    %2101 = vmatpush.bf16.msra.mxu0 %v1566
    %2102 = vmatmul.bf16.gmra.mxu0 %v908
    %v2103 = vpop.f32.mrf.mxu0
    %v2104 = vadd.f32 %v916, %v2103
    %v2105 = vpop.f32.mrf.mxu0
    %2106 = vdwg.mxu0
    %2107 = vmatpush.bf16.msra.mxu0 %v1641
    %2108 = vmatpush.bf16.msra.mxu0 %v1636
    %2109 = vmatpush.bf16.msra.mxu0 %v1631
    %2110 = vmatpush.bf16.msra.mxu0 %v1626
    %2111 = vmatpush.bf16.msra.mxu0 %v1621
    %2112 = vmatpush.bf16.msra.mxu0 %v1616
    %2113 = vmatpush.bf16.msra.mxu0 %v1611
    %2114 = vmatpush.bf16.msra.mxu0 %v1606
    %2115 = vmatmul.bf16.gmra.mxu0 %v909
    %v2116 = vpop.f32.mrf.mxu0
    %v2117 = vadd.f32 %v2104, %v2116
    %v2118 = vpop.f32.mrf.mxu0
    %2119 = vdwg.mxu0
    %2120 = vmatpush.bf16.msra.mxu0 %v1681
    %2121 = vmatpush.bf16.msra.mxu0 %v1676
    %2122 = vmatpush.bf16.msra.mxu0 %v1671
    %2123 = vmatpush.bf16.msra.mxu0 %v1666
    %2124 = vmatpush.bf16.msra.mxu0 %v1661
    %2125 = vmatpush.bf16.msra.mxu0 %v1656
    %2126 = vmatpush.bf16.msra.mxu0 %v1651
    %2127 = vmatpush.bf16.msra.mxu0 %v1646
    %2128 = vmatmul.bf16.gmra.mxu0 %v910
    %v2129 = vpop.f32.mrf.mxu0
    %v2130 = vadd.f32 %v2117, %v2129
    %v2131 = vpop.f32.mrf.mxu0
    %2132 = vdwg.mxu0
    %2133 = vmatpush.bf16.msra.mxu0 %v1721
    %2134 = vmatpush.bf16.msra.mxu0 %v1716
    %2135 = vmatpush.bf16.msra.mxu0 %v1711
    %2136 = vmatpush.bf16.msra.mxu0 %v1706
    %2137 = vmatpush.bf16.msra.mxu0 %v1701
    %2138 = vmatpush.bf16.msra.mxu0 %v1696
    %2139 = vmatpush.bf16.msra.mxu0 %v1691
    %2140 = vmatpush.bf16.msra.mxu0 %v1686
    %2141 = vmatmul.bf16.gmra.mxu0 %v911
    %v2142 = vpop.f32.mrf.mxu0
    %v2143 = vadd.f32 %v2130, %v2142
    %v2144 = vpop.f32.mrf.mxu0
    %2145 = vdwg.mxu0
    %2146 = vmatpush.bf16.msra.mxu0 %v1761
    %2147 = vmatpush.bf16.msra.mxu0 %v1756
    %2148 = vmatpush.bf16.msra.mxu0 %v1751
    %2149 = vmatpush.bf16.msra.mxu0 %v1746
    %2150 = vmatpush.bf16.msra.mxu0 %v1741
    %2151 = vmatpush.bf16.msra.mxu0 %v1736
    %2152 = vmatpush.bf16.msra.mxu0 %v1731
    %2153 = vmatpush.bf16.msra.mxu0 %v1726
    %2154 = vmatmul.bf16.gmra.mxu0 %v912
    %v2155 = vpop.f32.mrf.mxu0
    %v2156 = vadd.f32 %v2143, %v2155
    %v2157 = vpop.f32.mrf.mxu0
    %2158 = vdwg.mxu0
    %2159 = vmatpush.bf16.msra.mxu0 %v1602
    %2160 = vmatpush.bf16.msra.mxu0 %v1597
    %2161 = vmatpush.bf16.msra.mxu0 %v1592
    %2162 = vmatpush.bf16.msra.mxu0 %v1587
    %2163 = vmatpush.bf16.msra.mxu0 %v1582
    %2164 = vmatpush.bf16.msra.mxu0 %v1577
    %2165 = vmatpush.bf16.msra.mxu0 %v1572
    %2166 = vmatpush.bf16.msra.mxu0 %v1567
    %2167 = vmatmul.bf16.gmra.mxu0 %v908
    %v2168 = vpop.f32.mrf.mxu0
    %v2169 = vadd.f32 %v917, %v2168
    %v2170 = vpop.f32.mrf.mxu0
    %2171 = vdwg.mxu0
    %2172 = vmatpush.bf16.msra.mxu0 %v1642
    %2173 = vmatpush.bf16.msra.mxu0 %v1637
    %2174 = vmatpush.bf16.msra.mxu0 %v1632
    %2175 = vmatpush.bf16.msra.mxu0 %v1627
    %2176 = vmatpush.bf16.msra.mxu0 %v1622
    %2177 = vmatpush.bf16.msra.mxu0 %v1617
    %2178 = vmatpush.bf16.msra.mxu0 %v1612
    %2179 = vmatpush.bf16.msra.mxu0 %v1607
    %2180 = vmatmul.bf16.gmra.mxu0 %v909
    %v2181 = vpop.f32.mrf.mxu0
    %v2182 = vadd.f32 %v2169, %v2181
    %v2183 = vpop.f32.mrf.mxu0
    %2184 = vdwg.mxu0
    %2185 = vmatpush.bf16.msra.mxu0 %v1682
    %2186 = vmatpush.bf16.msra.mxu0 %v1677
    %2187 = vmatpush.bf16.msra.mxu0 %v1672
    %2188 = vmatpush.bf16.msra.mxu0 %v1667
    %2189 = vmatpush.bf16.msra.mxu0 %v1662
    %2190 = vmatpush.bf16.msra.mxu0 %v1657
    %2191 = vmatpush.bf16.msra.mxu0 %v1652
    %2192 = vmatpush.bf16.msra.mxu0 %v1647
    %2193 = vmatmul.bf16.gmra.mxu0 %v910
    %v2194 = vpop.f32.mrf.mxu0
    %v2195 = vadd.f32 %v2182, %v2194
    %v2196 = vpop.f32.mrf.mxu0
    %2197 = vdwg.mxu0
    %2198 = vmatpush.bf16.msra.mxu0 %v1722
    %2199 = vmatpush.bf16.msra.mxu0 %v1717
    %2200 = vmatpush.bf16.msra.mxu0 %v1712
    %2201 = vmatpush.bf16.msra.mxu0 %v1707
    %2202 = vmatpush.bf16.msra.mxu0 %v1702
    %2203 = vmatpush.bf16.msra.mxu0 %v1697
    %2204 = vmatpush.bf16.msra.mxu0 %v1692
    %2205 = vmatpush.bf16.msra.mxu0 %v1687
    %2206 = vmatmul.bf16.gmra.mxu0 %v911
    %v2207 = vpop.f32.mrf.mxu0
    %v2208 = vadd.f32 %v2195, %v2207
    %v2209 = vpop.f32.mrf.mxu0
    %2210 = vdwg.mxu0
    %2211 = vmatpush.bf16.msra.mxu0 %v1762
    %2212 = vmatpush.bf16.msra.mxu0 %v1757
    %2213 = vmatpush.bf16.msra.mxu0 %v1752
    %2214 = vmatpush.bf16.msra.mxu0 %v1747
    %2215 = vmatpush.bf16.msra.mxu0 %v1742
    %2216 = vmatpush.bf16.msra.mxu0 %v1737
    %2217 = vmatpush.bf16.msra.mxu0 %v1732
    %2218 = vmatpush.bf16.msra.mxu0 %v1727
    %2219 = vmatmul.bf16.gmra.mxu0 %v912
    %v2220 = vpop.f32.mrf.mxu0
    %v2221 = vadd.f32 %v2208, %v2220
    %v2222 = vpop.f32.mrf.mxu0
    %2223 = vdwg.mxu0
    %2224 = vmatpush.bf16.msra.mxu0 %v1603
    %2225 = vmatpush.bf16.msra.mxu0 %v1598
    %2226 = vmatpush.bf16.msra.mxu0 %v1593
    %2227 = vmatpush.bf16.msra.mxu0 %v1588
    %2228 = vmatpush.bf16.msra.mxu0 %v1583
    %2229 = vmatpush.bf16.msra.mxu0 %v1578
    %2230 = vmatpush.bf16.msra.mxu0 %v1573
    %2231 = vmatpush.bf16.msra.mxu0 %v1568
    %2232 = vmatmul.bf16.gmra.mxu0 %v908
    %v2233 = vpop.f32.mrf.mxu0
    %v2234 = vadd.f32 %v918, %v2233
    %v2235 = vpop.f32.mrf.mxu0
    %2236 = vdwg.mxu0
    %2237 = vmatpush.bf16.msra.mxu0 %v1643
    %2238 = vmatpush.bf16.msra.mxu0 %v1638
    %2239 = vmatpush.bf16.msra.mxu0 %v1633
    %2240 = vmatpush.bf16.msra.mxu0 %v1628
    %2241 = vmatpush.bf16.msra.mxu0 %v1623
    %2242 = vmatpush.bf16.msra.mxu0 %v1618
    %2243 = vmatpush.bf16.msra.mxu0 %v1613
    %2244 = vmatpush.bf16.msra.mxu0 %v1608
    %2245 = vmatmul.bf16.gmra.mxu0 %v909
    %v2246 = vpop.f32.mrf.mxu0
    %v2247 = vadd.f32 %v2234, %v2246
    %v2248 = vpop.f32.mrf.mxu0
    %2249 = vdwg.mxu0
    %2250 = vmatpush.bf16.msra.mxu0 %v1683
    %2251 = vmatpush.bf16.msra.mxu0 %v1678
    %2252 = vmatpush.bf16.msra.mxu0 %v1673
    %2253 = vmatpush.bf16.msra.mxu0 %v1668
    %2254 = vmatpush.bf16.msra.mxu0 %v1663
    %2255 = vmatpush.bf16.msra.mxu0 %v1658
    %2256 = vmatpush.bf16.msra.mxu0 %v1653
    %2257 = vmatpush.bf16.msra.mxu0 %v1648
    %2258 = vmatmul.bf16.gmra.mxu0 %v910
    %v2259 = vpop.f32.mrf.mxu0
    %v2260 = vadd.f32 %v2247, %v2259
    %v2261 = vpop.f32.mrf.mxu0
    %2262 = vdwg.mxu0
    %2263 = vmatpush.bf16.msra.mxu0 %v1723
    %2264 = vmatpush.bf16.msra.mxu0 %v1718
    %2265 = vmatpush.bf16.msra.mxu0 %v1713
    %2266 = vmatpush.bf16.msra.mxu0 %v1708
    %2267 = vmatpush.bf16.msra.mxu0 %v1703
    %2268 = vmatpush.bf16.msra.mxu0 %v1698
    %2269 = vmatpush.bf16.msra.mxu0 %v1693
    %2270 = vmatpush.bf16.msra.mxu0 %v1688
    %2271 = vmatmul.bf16.gmra.mxu0 %v911
    %v2272 = vpop.f32.mrf.mxu0
    %v2273 = vadd.f32 %v2260, %v2272
    %v2274 = vpop.f32.mrf.mxu0
    %2275 = vdwg.mxu0
    %2276 = vmatpush.bf16.msra.mxu0 %v1763
    %2277 = vmatpush.bf16.msra.mxu0 %v1758
    %2278 = vmatpush.bf16.msra.mxu0 %v1753
    %2279 = vmatpush.bf16.msra.mxu0 %v1748
    %2280 = vmatpush.bf16.msra.mxu0 %v1743
    %2281 = vmatpush.bf16.msra.mxu0 %v1738
    %2282 = vmatpush.bf16.msra.mxu0 %v1733
    %2283 = vmatpush.bf16.msra.mxu0 %v1728
    %2284 = vmatmul.bf16.gmra.mxu0 %v912
    %v2285 = vpop.f32.mrf.mxu0
    %v2286 = vadd.f32 %v2273, %v2285
    %v2287 = vpop.f32.mrf.mxu0
    %2288 = vdwg.mxu0
    %v2289 = vmax.f32 %v2026, 0.0
    %v2290 = vmax.f32 %v2091, 0.0
    %v2291 = vmax.f32 %v2156, 0.0
    %v2292 = vmax.f32 %v2221, 0.0
    %v2293 = vmax.f32 %v2286, 0.0
    %v2294 = vld [vmem:[#allocation12] sm:$0xf]
    %v2295 = vld [vmem:[#allocation12 + $0x4] sm:$0xf]
    %v2296 = vld [vmem:[#allocation12 + $0x8] sm:$0xf]
    %v2297 = vld [vmem:[#allocation12 + $0xc] sm:$0xf]
    %v2298 = vld [vmem:[#allocation12 + $0x10] sm:$0xf]
    %v2299 = vld [vmem:[#allocation12 + $0x14] sm:$0xf]
    %v2300 = vld [vmem:[#allocation12 + $0x18] sm:$0xf]
    %v2301 = vld [vmem:[#allocation12 + $0x1c] sm:$0xf]
    %v2302 = vld [vmem:[#allocation12 + $0x20] sm:$0xf]
    %v2303 = vld [vmem:[#allocation12 + $0x24] sm:$0xf]
    %v2304 = vld [vmem:[#allocation12 + $0x28] sm:$0xf]
    %v2305 = vld [vmem:[#allocation12 + $0x2c] sm:$0xf]
    %v2306 = vld [vmem:[#allocation12 + $0x30] sm:$0xf]
    %v2307 = vld [vmem:[#allocation12 + $0x34] sm:$0xf]
    %v2308 = vld [vmem:[#allocation12 + $0x38] sm:$0xf]
    %v2309 = vld [vmem:[#allocation12 + $0x3c] sm:$0xf]
    %v2310 = vld [vmem:[#allocation12 + $0x40] sm:$0xf]
    %v2311 = vld [vmem:[#allocation12 + $0x44] sm:$0xf]
    %v2312 = vld [vmem:[#allocation12 + $0x48] sm:$0xf]
    %v2313 = vld [vmem:[#allocation12 + $0x4c] sm:$0xf]
    %v2314 = vld [vmem:[#allocation12 + $0x50] sm:$0xf]
    %v2315 = vld [vmem:[#allocation12 + $0x54] sm:$0xf]
    %v2316 = vld [vmem:[#allocation12 + $0x58] sm:$0xf]
    %v2317 = vld [vmem:[#allocation12 + $0x5c] sm:$0xf]
    %v2318 = vld [vmem:[#allocation12 + $0x60] sm:$0xf]
    %v2319 = vld [vmem:[#allocation12 + $0x64] sm:$0xf]
    %v2320 = vld [vmem:[#allocation12 + $0x68] sm:$0xf]
    %v2321 = vld [vmem:[#allocation12 + $0x6c] sm:$0xf]
    %v2322 = vld [vmem:[#allocation12 + $0x70] sm:$0xf]
    %v2323 = vld [vmem:[#allocation12 + $0x74] sm:$0xf]
    %v2324 = vld [vmem:[#allocation12 + $0x78] sm:$0xf]
    %v2325 = vld [vmem:[#allocation12 + $0x7c] sm:$0xf]
    %v2326 = vld [vmem:[#allocation12 + $0x80] sm:$0xf]
    %v2327 = vld [vmem:[#allocation12 + $0x84] sm:$0xf]
    %v2328 = vld [vmem:[#allocation12 + $0x88] sm:$0xf]
    %v2329 = vld [vmem:[#allocation12 + $0x8c] sm:$0xf]
    %v2330 = vld [vmem:[#allocation12 + $0x90] sm:$0xf]
    %v2331 = vld [vmem:[#allocation12 + $0x94] sm:$0xf]
    %v2332 = vld [vmem:[#allocation12 + $0x98] sm:$0xf]
    %v2333 = vld [vmem:[#allocation12 + $0x9c] sm:$0xf]
    %v2334 = vld [vmem:[#allocation12 + $0xa0] sm:$0xf]
    %v2335 = vld [vmem:[#allocation12 + $0xa4] sm:$0xf]
    %v2336 = vld [vmem:[#allocation12 + $0xa8] sm:$0xf]
    %v2337 = vld [vmem:[#allocation12 + $0xac] sm:$0xf]
    %v2338 = vld [vmem:[#allocation12 + $0xb0] sm:$0xf]
    %v2339 = vld [vmem:[#allocation12 + $0xb4] sm:$0xf]
    %v2340 = vld [vmem:[#allocation12 + $0xb8] sm:$0xf]
    %v2341 = vld [vmem:[#allocation12 + $0xbc] sm:$0xf]
    %v2342 = vld [vmem:[#allocation12 + $0xc0] sm:$0xf]
    %v2343 = vld [vmem:[#allocation12 + $0xc4] sm:$0xf]
    %v2344 = vld [vmem:[#allocation12 + $0xc8] sm:$0xf]
    %v2345 = vld [vmem:[#allocation12 + $0xcc] sm:$0xf]
    %v2346 = vld [vmem:[#allocation12 + $0xd0] sm:$0xf]
    %v2347 = vld [vmem:[#allocation12 + $0xd4] sm:$0xf]
    %v2348 = vld [vmem:[#allocation12 + $0xd8] sm:$0xf]
    %v2349 = vld [vmem:[#allocation12 + $0xdc] sm:$0xf]
    %v2350 = vld [vmem:[#allocation12 + $0xe0] sm:$0xf]
    %v2351 = vld [vmem:[#allocation12 + $0xe4] sm:$0xf]
    %v2352 = vld [vmem:[#allocation12 + $0xe8] sm:$0xf]
    %v2353 = vld [vmem:[#allocation12 + $0xec] sm:$0xf]
    %v2354 = vld [vmem:[#allocation12 + $0xf0] sm:$0xf]
    %v2355 = vld [vmem:[#allocation12 + $0xf4] sm:$0xf]
    %v2356 = vld [vmem:[#allocation12 + $0xf8] sm:$0xf]
    %v2357 = vld [vmem:[#allocation12 + $0xfc] sm:$0xf]
    %v2358 = vld [vmem:[#allocation12 + $0x100] sm:$0xf]
    %v2359 = vld [vmem:[#allocation12 + $0x104] sm:$0xf]
    %v2360 = vld [vmem:[#allocation12 + $0x108] sm:$0xf]
    %v2361 = vld [vmem:[#allocation12 + $0x10c] sm:$0xf]
    %v2362 = vld [vmem:[#allocation12 + $0x110] sm:$0xf]
    %v2363 = vld [vmem:[#allocation12 + $0x114] sm:$0xf]
    %v2364 = vld [vmem:[#allocation12 + $0x118] sm:$0xf]
    %v2365 = vld [vmem:[#allocation12 + $0x11c] sm:$0xf]
    %v2366 = vld [vmem:[#allocation12 + $0x120] sm:$0xf]
    %v2367 = vld [vmem:[#allocation12 + $0x124] sm:$0xf]
    %v2368 = vld [vmem:[#allocation12 + $0x128] sm:$0xf]
    %v2369 = vld [vmem:[#allocation12 + $0x12c] sm:$0xf]
    %v2370 = vld [vmem:[#allocation12 + $0x130] sm:$0xf]
    %v2371 = vld [vmem:[#allocation12 + $0x134] sm:$0xf]
    %v2372 = vld [vmem:[#allocation12 + $0x138] sm:$0xf]
    %v2373 = vld [vmem:[#allocation12 + $0x13c] sm:$0xf]
    %v2374 = vpack.c.bf16 %v2289, %v2289
    %v2375 = vpack.c.bf16 %v2290, %v2290
    %v2376 = vpack.c.bf16 %v2291, %v2291
    %v2377 = vpack.c.bf16 %v2292, %v2292
    %v2378 = vpack.c.bf16 %v2293, %v2293
    %v2459 = vunpack.c.l.b16 %v2294
    %v2460 = vunpack.c.l.b16 %v2295
    %v2461 = vunpack.c.l.b16 %v2296
    %v2462 = vunpack.c.l.b16 %v2297
    %v2463 = vunpack.c.l.b16 %v2298
    %v2464 = vunpack.c.l.b16 %v2299
    %v2465 = vunpack.c.l.b16 %v2300
    %v2466 = vunpack.c.l.b16 %v2301
    %v2467 = vunpack.c.l.b16 %v2302
    %v2468 = vunpack.c.l.b16 %v2303
    %v2469 = vunpack.c.l.b16 %v2304
    %v2470 = vunpack.c.l.b16 %v2305
    %v2471 = vunpack.c.l.b16 %v2306
    %v2472 = vunpack.c.l.b16 %v2307
    %v2473 = vunpack.c.l.b16 %v2308
    %v2474 = vunpack.c.l.b16 %v2309
    %v2475 = vunpack.c.l.b16 %v2310
    %v2476 = vunpack.c.l.b16 %v2311
    %v2477 = vunpack.c.l.b16 %v2312
    %v2478 = vunpack.c.l.b16 %v2313
    %v2479 = vunpack.c.l.b16 %v2314
    %v2480 = vunpack.c.l.b16 %v2315
    %v2481 = vunpack.c.l.b16 %v2316
    %v2482 = vunpack.c.l.b16 %v2317
    %v2483 = vunpack.c.l.b16 %v2318
    %v2484 = vunpack.c.l.b16 %v2319
    %v2485 = vunpack.c.l.b16 %v2320
    %v2486 = vunpack.c.l.b16 %v2321
    %v2487 = vunpack.c.l.b16 %v2322
    %v2488 = vunpack.c.l.b16 %v2323
    %v2489 = vunpack.c.l.b16 %v2324
    %v2490 = vunpack.c.l.b16 %v2325
    %v2491 = vunpack.c.l.b16 %v2326
    %v2492 = vunpack.c.l.b16 %v2327
    %v2493 = vunpack.c.l.b16 %v2328
    %v2494 = vunpack.c.l.b16 %v2329
    %v2495 = vunpack.c.l.b16 %v2330
    %v2496 = vunpack.c.l.b16 %v2331
    %v2497 = vunpack.c.l.b16 %v2332
    %v2498 = vunpack.c.l.b16 %v2333
    %v2499 = vunpack.c.l.b16 %v2334
    %v2500 = vunpack.c.l.b16 %v2335
    %v2501 = vunpack.c.l.b16 %v2336
    %v2502 = vunpack.c.l.b16 %v2337
    %v2503 = vunpack.c.l.b16 %v2338
    %v2504 = vunpack.c.l.b16 %v2339
    %v2505 = vunpack.c.l.b16 %v2340
    %v2506 = vunpack.c.l.b16 %v2341
    %v2507 = vunpack.c.l.b16 %v2342
    %v2508 = vunpack.c.l.b16 %v2343
    %v2509 = vunpack.c.l.b16 %v2344
    %v2510 = vunpack.c.l.b16 %v2345
    %v2511 = vunpack.c.l.b16 %v2346
    %v2512 = vunpack.c.l.b16 %v2347
    %v2513 = vunpack.c.l.b16 %v2348
    %v2514 = vunpack.c.l.b16 %v2349
    %v2515 = vunpack.c.l.b16 %v2350
    %v2516 = vunpack.c.l.b16 %v2351
    %v2517 = vunpack.c.l.b16 %v2352
    %v2518 = vunpack.c.l.b16 %v2353
    %v2519 = vunpack.c.l.b16 %v2354
    %v2520 = vunpack.c.l.b16 %v2355
    %v2521 = vunpack.c.l.b16 %v2356
    %v2522 = vunpack.c.l.b16 %v2357
    %v2523 = vunpack.c.l.b16 %v2358
    %v2524 = vunpack.c.l.b16 %v2359
    %v2525 = vunpack.c.l.b16 %v2360
    %v2526 = vunpack.c.l.b16 %v2361
    %v2527 = vunpack.c.l.b16 %v2362
    %v2528 = vunpack.c.l.b16 %v2363
    %v2529 = vunpack.c.l.b16 %v2364
    %v2530 = vunpack.c.l.b16 %v2365
    %v2531 = vunpack.c.l.b16 %v2366
    %v2532 = vunpack.c.l.b16 %v2367
    %v2533 = vunpack.c.l.b16 %v2368
    %v2534 = vunpack.c.l.b16 %v2369
    %v2535 = vunpack.c.l.b16 %v2370
    %v2536 = vunpack.c.l.b16 %v2371
    %v2537 = vunpack.c.l.b16 %v2372
    %v2538 = vunpack.c.l.b16 %v2373
    %v2539 = vpack.c.b16 %v2460, %v2459
    %v2540 = vpack.c.b16 %v2462, %v2461
    %v2541 = vpack.c.b16 %v2464, %v2463
    %v2542 = vpack.c.b16 %v2466, %v2465
    %v2543 = vpack.c.b16 %v2468, %v2467
    %v2544 = vpack.c.b16 %v2470, %v2469
    %v2545 = vpack.c.b16 %v2472, %v2471
    %v2546 = vpack.c.b16 %v2474, %v2473
    %v2547 = vpack.c.b16 %v2476, %v2475
    %v2548 = vpack.c.b16 %v2478, %v2477
    %v2549 = vpack.c.b16 %v2480, %v2479
    %v2550 = vpack.c.b16 %v2482, %v2481
    %v2551 = vpack.c.b16 %v2484, %v2483
    %v2552 = vpack.c.b16 %v2486, %v2485
    %v2553 = vpack.c.b16 %v2488, %v2487
    %v2554 = vpack.c.b16 %v2490, %v2489
    %v2555 = vpack.c.b16 %v2492, %v2491
    %v2556 = vpack.c.b16 %v2494, %v2493
    %v2557 = vpack.c.b16 %v2496, %v2495
    %v2558 = vpack.c.b16 %v2498, %v2497
    %v2559 = vpack.c.b16 %v2500, %v2499
    %v2560 = vpack.c.b16 %v2502, %v2501
    %v2561 = vpack.c.b16 %v2504, %v2503
    %v2562 = vpack.c.b16 %v2506, %v2505
    %v2563 = vpack.c.b16 %v2508, %v2507
    %v2564 = vpack.c.b16 %v2510, %v2509
    %v2565 = vpack.c.b16 %v2512, %v2511
    %v2566 = vpack.c.b16 %v2514, %v2513
    %v2567 = vpack.c.b16 %v2516, %v2515
    %v2568 = vpack.c.b16 %v2518, %v2517
    %v2569 = vpack.c.b16 %v2520, %v2519
    %v2570 = vpack.c.b16 %v2522, %v2521
    %v2571 = vpack.c.b16 %v2524, %v2523
    %v2572 = vpack.c.b16 %v2526, %v2525
    %v2573 = vpack.c.b16 %v2528, %v2527
    %v2574 = vpack.c.b16 %v2530, %v2529
    %v2575 = vpack.c.b16 %v2532, %v2531
    %v2576 = vpack.c.b16 %v2534, %v2533
    %v2577 = vpack.c.b16 %v2536, %v2535
    %v2578 = vpack.c.b16 %v2538, %v2537
    %2619 = vmatpush.bf16.msra.mxu0 %v2546
    %2620 = vmatpush.bf16.msra.mxu0 %v2545
    %2621 = vmatpush.bf16.msra.mxu0 %v2544
    %2622 = vmatpush.bf16.msra.mxu0 %v2543
    %2623 = vmatpush.bf16.msra.mxu0 %v2542
    %2624 = vmatpush.bf16.msra.mxu0 %v2541
    %2625 = vmatpush.bf16.msra.mxu0 %v2540
    %2626 = vmatpush.bf16.msra.mxu0 %v2539
    %2627 = vmatmul.bf16.gmra.mxu0 %v2374
    %v2628 = vpop.f32.mrf.mxu0
    %v2629 = vadd.f32 %v422, %v2628
    %v2630 = vpop.f32.mrf.mxu0
    %2631 = vdwg.mxu0
    %2632 = vmatpush.bf16.msra.mxu0 %v2554
    %2633 = vmatpush.bf16.msra.mxu0 %v2553
    %2634 = vmatpush.bf16.msra.mxu0 %v2552
    %2635 = vmatpush.bf16.msra.mxu0 %v2551
    %2636 = vmatpush.bf16.msra.mxu0 %v2550
    %2637 = vmatpush.bf16.msra.mxu0 %v2549
    %2638 = vmatpush.bf16.msra.mxu0 %v2548
    %2639 = vmatpush.bf16.msra.mxu0 %v2547
    %2640 = vmatmul.bf16.gmra.mxu0 %v2375
    %v2641 = vpop.f32.mrf.mxu0
    %v2642 = vadd.f32 %v2629, %v2641
    %v2643 = vpop.f32.mrf.mxu0
    %2644 = vdwg.mxu0
    %2645 = vmatpush.bf16.msra.mxu0 %v2562
    %2646 = vmatpush.bf16.msra.mxu0 %v2561
    %2647 = vmatpush.bf16.msra.mxu0 %v2560
    %2648 = vmatpush.bf16.msra.mxu0 %v2559
    %2649 = vmatpush.bf16.msra.mxu0 %v2558
    %2650 = vmatpush.bf16.msra.mxu0 %v2557
    %2651 = vmatpush.bf16.msra.mxu0 %v2556
    %2652 = vmatpush.bf16.msra.mxu0 %v2555
    %2653 = vmatmul.bf16.gmra.mxu0 %v2376
    %v2654 = vpop.f32.mrf.mxu0
    %v2655 = vadd.f32 %v2642, %v2654
    %v2656 = vpop.f32.mrf.mxu0
    %2657 = vdwg.mxu0
    %2658 = vmatpush.bf16.msra.mxu0 %v2570
    %2659 = vmatpush.bf16.msra.mxu0 %v2569
    %2660 = vmatpush.bf16.msra.mxu0 %v2568
    %2661 = vmatpush.bf16.msra.mxu0 %v2567
    %2662 = vmatpush.bf16.msra.mxu0 %v2566
    %2663 = vmatpush.bf16.msra.mxu0 %v2565
    %2664 = vmatpush.bf16.msra.mxu0 %v2564
    %2665 = vmatpush.bf16.msra.mxu0 %v2563
    %2666 = vmatmul.bf16.gmra.mxu0 %v2377
    %v2667 = vpop.f32.mrf.mxu0
    %v2668 = vadd.f32 %v2655, %v2667
    %v2669 = vpop.f32.mrf.mxu0
    %2670 = vdwg.mxu0
    %2671 = vmatpush.bf16.msra.mxu0 %v2578
    %2672 = vmatpush.bf16.msra.mxu0 %v2577
    %2673 = vmatpush.bf16.msra.mxu0 %v2576
    %2674 = vmatpush.bf16.msra.mxu0 %v2575
    %2675 = vmatpush.bf16.msra.mxu0 %v2574
    %2676 = vmatpush.bf16.msra.mxu0 %v2573
    %2677 = vmatpush.bf16.msra.mxu0 %v2572
    %2678 = vmatpush.bf16.msra.mxu0 %v2571
    %2679 = vmatmul.bf16.gmra.mxu0 %v2378
    %v2680 = vpop.f32.mrf.mxu0
    %v2681 = vadd.f32 %v2668, %v2680
    %v2682 = vpop.f32.mrf.mxu0
    %2683 = vdwg.mxu0
    %v2684 = vsub.f32 0.0, %v2681
    %v2685 = vmul.f32 %v2684, 1.442695
    %v2686 = vpow.pop %v2685
    %v2687 = vadd.f32 %v2686, 1.0
    %v2688 = vrcp.pop %v2687
    %v2689 = vmul.f32 %v2687, %v2688
    %v2690 = vsub.f32 1.0, %v2689
    %v2691 = vmul.f32 %v2688, %v2690
    %v2692 = vadd.f32 %v2688, %v2691
    %vm2693 = vweird.f32 %v2687
    %vm2694 = vweird.f32 %v2688
    %vm2695 = vmor %vm2693, %vm2694
    %v2696 = vsel %vm2695, %v2688, %v2692
    %v2697 = vand.u32 2147483647, %v2687
    %vm2698 = vcmp.eq.f32.partialorder %v2697, 8.507059e+37
    %v2699 = vand.u32 %v2687, 2147483648
    %v2700 = vor.u32 1.1754944e-38, %v2699
    %v2701 = vsel %vm2698, %v2700, %v2696
    %v2702 = vmul.f32 1.0, %v2701
    %2704 = vrot.lane.b32.xlu0 %v376, 16
    %v2705 = vpop.permute.xlu0 %2704
    %2708 = vrot.lane.b32.xlu0 %v399, 24
    %v2709 = vpop.permute.xlu0 %2708
    %2712 = vrot.lane.b32.xlu0 %v414, 24
    %v2713 = vpop.permute.xlu0 %2712
    %2716 = vrot.lane.b32.xlu0 %v223, 40
    %v2717 = vpop.permute.xlu0 %2716
    %2720 = vrot.lane.b32.xlu0 %v249, 46
    %v2721 = vpop.permute.xlu0 %2720
    %2723 = vrot.lane.b32.xlu0 %v280, 52
    %v2724 = vpop.permute.xlu0 %2723
    %v2726 = vsel %vm426, %v338, %v353
    %vm2727 = vcmask 130048
    %v2728 = vsel %vm2727, %v2726, %v2705
    %v2729 = vsel %vm488, %v2728, %v2709
    %vm2730 = vcmask 261120
    %v2731 = vsel %vm2730, %v2729, %v2713
    %vm2732 = vcmask 326656
    %v2733 = vsel %vm2732, %v2731, %v2717
    %vm2734 = vcmask 375808
    %v2735 = vsel %vm2734, %v2733, %v2721
    %vm2736 = vcmask 424960
    %v2737 = vsel %vm2736, %v2735, %v2724
    %vm2738 = vcmask 474112
    %v2739 = vsel %vm2738, %v2737, 0.0
    %2740 = vst [vmem:[#allocation14] sm:$0xff] %v2739
    %2741 = vst [vmem:[#allocation15] sm:$0xff] %v2702
    %2742 = vst [vmem:[#allocation17] sm:$0xff] %v607
    %2743 = vst [vmem:[#allocation17 + $0x8] sm:$0xff] %v622
    %2744 = vst [vmem:[#allocation17 + $0x10] sm:$0xff] %v637
    %2745 = vst [vmem:[#allocation17 + $0x18] sm:$0xff] %v652
    %2746 = vst [vmem:[#allocation17 + $0x20] sm:$0xff] %v667
    // Predicated region
    $region54: #{tpu_custom_call.1} parent=1 // pred_check
      _
    $region55: #{tpu_custom_call.1} parent=1 // pred_check_branch
      %2748 = sbr.rel (0) target = $region57
    $region56: #{tpu_custom_call.1} parent=1 // pred_region
      %2750 = vsyncadd [#allocation5], 0
      %s2752 = sshll.u32 [#allocation14], 4
      %s2753 = int_to_ptr.vmem [resolvable:$true] %s2752
      %s2754 = sshll.u32 %s7, 4
      %s2755 = int_to_ptr.hbm [resolvable:$true] %s2754
      %2757 = dma.vmem_to_hbm [thread:$0]  %s2753, 128, %s2755, [#allocation5]
    $region57: #{tpu_custom_call.1} parent=1 // pred_fallthru
      _
    // Predicated region
    $region58: #{tpu_custom_call.1} parent=1 // pred_check
      _
    $region59: #{tpu_custom_call.1} parent=1 // pred_check_branch
      %2759 = sbr.rel (0) target = $region61
    $region60: #{tpu_custom_call.1} parent=1 // pred_region
      %2761 = vsyncadd [#allocation16], 0
      %s2763 = sshll.u32 [#allocation15], 4
      %s2764 = int_to_ptr.vmem [resolvable:$true] %s2763
      %s2765 = sshll.u32 %s8, 4
      %s2766 = int_to_ptr.hbm [resolvable:$true] %s2765
      %2768 = dma.vmem_to_hbm [thread:$0]  %s2764, 128, %s2766, [#allocation16]
    $region61: #{tpu_custom_call.1} parent=1 // pred_fallthru
      _
    // Predicated region
    $region62: #{tpu_custom_call.1} parent=1 // pred_check
      _
    $region63: #{tpu_custom_call.1} parent=1 // pred_check_branch
      %2770 = sbr.rel (0) target = $region65
    $region64: #{tpu_custom_call.1} parent=1 // pred_region
      %2772 = vsyncadd [#allocation16], 0
      %s2774 = sshll.u32 [#allocation17], 4
      %s2775 = int_to_ptr.vmem [resolvable:$true] %s2774
      %s2776 = sshll.u32 %s9, 4
      %s2777 = int_to_ptr.hbm [resolvable:$true] %s2776
      %2779 = dma.vmem_to_hbm [thread:$0]  %s2775, 640, %s2777, [#allocation16]
    $region65: #{tpu_custom_call.1} parent=1 // pred_fallthru
      _
    // Predicated region
    $region66: #{tpu_custom_call.1} parent=1 // pred_check
      _
    $region67: #{tpu_custom_call.1} parent=1 // pred_check_branch
      %2781 = sbr.rel (0) target = $region69
    $region68: #{tpu_custom_call.1} parent=1 // pred_region
      %2783 = dma.done [#allocation5], 128
    $region69: #{tpu_custom_call.1} parent=1 // pred_fallthru
      _
    // Predicated region
    $region70: #{tpu_custom_call.1} parent=1 // pred_check
      _
    $region71: #{tpu_custom_call.1} parent=1 // pred_check_branch
      %2785 = sbr.rel (0) target = $region73
    $region72: #{tpu_custom_call.1} parent=1 // pred_region
      %2787 = dma.done [#allocation16], 128
    $region73: #{tpu_custom_call.1} parent=1 // pred_fallthru
      _
    // Predicated region
    $region74: #{tpu_custom_call.1} parent=1 // pred_check
      _
    $region75: #{tpu_custom_call.1} parent=1 // pred_check_branch
      %2789 = sbr.rel (0) target = $region77
    $region76: #{tpu_custom_call.1} parent=1 // pred_region
      %2791 = dma.done [#allocation16], 640
    $region77: #{tpu_custom_call.1} parent=1 // pred_fallthru
      _
    %2792 = vsyncpa [#allocation4], 1
    %2793 = vsyncpa [#allocation7], 1
    %2794 = vsyncpa [#allocation10], 1
    %2795 = vsyncpa [#allocation13], 1
    %2796 = vsyncpa [#allocation5], 1
    %2797 = vsyncpa [#allocation16], 1

</llo_original>
